<compile_context>
chip_gen: v7x
topology: tpu7x:2x2x1
jax: 0.10.0
libtpu: 0.0.40
codegen_flags: <defaults>
</compile_context>

<pallas_src>
import jax
import jax.numpy as jnp
from jax import lax
from jax.experimental import pallas as pl
from jax.experimental.pallas import tpu as pltpu

# ---------------- model hyper-parameters (small, synthetic) ----------------
B = 2            # batch
S = 8            # sequence length
H = 32           # hidden size (koBERT uses 768; scaled down)
NH = 2           # attention heads
DH = H // NH     # head dim
FF = 64          # feed-forward dim
L = 2            # transformer layers
C = 3            # num classes
V = 100          # vocab size
CP = 128         # lane-padded classifier width (sliced back to C outside)
SP = 8           # sublane-padded output rows (row 0 holds the real logits)
NEG_INF = -1e9


def _layer_norm(x, g, b, eps=1e-12):
    mu = jnp.mean(x, axis=-1, keepdims=True)
    var = jnp.mean((x - mu) ** 2, axis=-1, keepdims=True)
    return (x - mu) * lax.rsqrt(var + eps) * g + b


def _gelu(x):
    # tanh-approximate GELU.
    # TODO(synk): PyTorch BERT uses the exact erf GELU; swap in lax.erf if
    # bit-level parity with the reference is required.
    return 0.5 * x * (1.0 + jnp.tanh(0.7978845608028654 * (x + 0.044715 * x * x * x)))


def kobert_kernel(
    vl_ref,                    # (B,) int32  SMEM scalar prefetch (valid_length)
    emb_ref,                   # (S, H) f32  this batch's embeddings
    gvec_ref,                  # (3, H) f32  [emb_ln_g, emb_ln_b, pooler_b]
    wqkv_ref, bqkv_ref,        # (L, H, 3H) bf16 / (L, 1, 3H) f32   fused QKV
    wo_ref,                    # (L, H, H)  bf16
    w1_ref, b1_ref,            # (L, H, FF) bf16 / (L, 1, FF) f32
    w2_ref,                    # (L, FF, H) bf16
    lvec_ref,                  # (L, 6, H)  f32  [bo, ln1_g, ln1_b, b2, ln2_g, ln2_b]
    wp_ref,                    # (H, H)  bf16    pooler
    wc_ref, bc_ref,            # (H, CP) bf16 / (1, CP) f32  classifier (lane padded)
    out_ref,                   # (1, SP, CP) f32
):
    b = pl.program_id(0)
    scale = 1.0 / (DH ** 0.5)

    # gen_attention_mask: key positions >= valid_length[b] get -inf bias.
    # Hoisted out of the layer/head loops (iota + select emitted once).
    col = lax.broadcasted_iota(jnp.int32, (1, S), 1)
    bias = jnp.where(col < vl_ref[b], 0.0, NEG_INF).astype(jnp.float32)   # (1, S)

    gv = gvec_ref[...]
    x = _layer_norm(emb_ref[...], gv[0:1, :], gv[1:2, :])                 # (S, H) f32

    for l in range(L):
        lv = lvec_ref[l]                                                  # (6, H)

        # fused QKV projection: one MXU pass with N = 3H
        qkv = jnp.dot(x.astype(jnp.bfloat16), wqkv_ref[l],
                      preferred_element_type=jnp.float32) + bqkv_ref[l]   # (S, 3H)

        # attention: tiny unrolled head loop, everything stays in registers
        # (no VMEM scratch round-trip, no masked strided stores).
        ctx_heads = []
        for h in range(NH):
            qh = qkv[:, h * DH:(h + 1) * DH]                # (S, DH)
            kh = qkv[:, H + h * DH:H + (h + 1) * DH]
            vh = qkv[:, 2 * H + h * DH:2 * H + (h + 1) * DH]

            s = lax.dot_general(qh, kh, (((1,), (1,)), ((), ())),
                                preferred_element_type=jnp.float32) * scale + bias
            s = s - jnp.max(s, axis=-1, keepdims=True)
            p = jnp.exp(s)
            p = p * pl.reciprocal(jnp.sum(p, axis=-1, keepdims=True), approx=True)
            ctx_heads.append(jnp.dot(p, vh, preferred_element_type=jnp.float32))
        ctx = jnp.concatenate(ctx_heads, axis=-1)                         # (S, H)

        attn = jnp.dot(ctx.astype(jnp.bfloat16), wo_ref[l],
                       preferred_element_type=jnp.float32) + lv[0:1, :]
        x = _layer_norm(x + attn, lv[1:2, :], lv[2:3, :])

        ff = _gelu(jnp.dot(x.astype(jnp.bfloat16), w1_ref[l],
                           preferred_element_type=jnp.float32) + b1_ref[l])
        ff = jnp.dot(ff.astype(jnp.bfloat16), w2_ref[l],
                     preferred_element_type=jnp.float32) + lv[3:4, :]
        x = _layer_norm(x + ff, lv[4:5, :], lv[5:6, :])

    # pooler: tanh(W_p @ hidden[CLS] + b_p); CLS is row 0 of this batch block.
    pooled = jnp.tanh(jnp.dot(x[0:1, :].astype(jnp.bfloat16), wp_ref[...],
                              preferred_element_type=jnp.float32) + gv[2:3, :])

    # dr_rate=None in the module default -> dropout is identity.
    # TODO(synk): stochastic dropout via pltpu.prng_* if dr_rate is set / training.

    logits = jnp.dot(pooled.astype(jnp.bfloat16), wc_ref[...],
                     preferred_element_type=jnp.float32) + bc_ref[...]    # (1, CP)

    # lane- and sublane-dense full-block store; real logits are row 0, cols [:C].
    out_ref[...] = jnp.broadcast_to(logits[None, :, :], (1, SP, CP))


def init_params(key):
    def nrm(k, shape, scale=0.02, dtype=jnp.float32):
        return (scale * jax.random.normal(k, shape)).astype(dtype)

    ks = jax.random.split(key, 12)
    ones_l = jnp.ones((L, 1, H), jnp.float32)
    zeros_l = jnp.zeros((L, 1, H), jnp.float32)

    wc_pad = jnp.zeros((H, CP), jnp.float32).at[:, :C].set(nrm(ks[8], (H, C)))

    return {
        # embeddings (gathered in plain JAX glue)
        "word_emb": nrm(ks[0], (V, H)),
        "pos_emb": nrm(ks[1], (S, H)),
        "type_emb": nrm(ks[2], (2, H)),
        # packed global vectors: [emb_ln_g, emb_ln_b, pooler_b]
        "gvecs": jnp.concatenate([jnp.ones((1, H), jnp.float32),
                                  jnp.zeros((1, H), jnp.float32),
                                  jnp.zeros((1, H), jnp.float32)], axis=0),
        # fused QKV + attention output projection (bf16 weights for the MXU)
        "wqkv": nrm(ks[3], (L, H, 3 * H), dtype=jnp.bfloat16),
        "bqkv": jnp.zeros((L, 1, 3 * H), jnp.float32),
        "wo": nrm(ks[4], (L, H, H), dtype=jnp.bfloat16),
        # FFN
        "w1": nrm(ks[5], (L, H, FF), dtype=jnp.bfloat16),
        "b1": jnp.zeros((L, 1, FF), jnp.float32),
        "w2": nrm(ks[6], (L, FF, H), dtype=jnp.bfloat16),
        # packed per-layer vectors: [bo, ln1_g, ln1_b, b2, ln2_g, ln2_b]
        "lvecs": jnp.concatenate([zeros_l, ones_l, zeros_l,
                                  zeros_l, ones_l, zeros_l], axis=1),
        # pooler + classifier (classifier lane-padded to CP)
        "wp": nrm(ks[7], (H, H), dtype=jnp.bfloat16),
        "wc": wc_pad.astype(jnp.bfloat16),
        "bc": jnp.zeros((1, CP), jnp.float32),
    }


@jax.jit
def kobert_classifier_forward(token_ids, valid_length, segment_ids, params):
    # ---- glue (plain JAX): embedding gathers & flatten to (B*S, H) ----
    emb = (params["word_emb"][token_ids]
           + params["pos_emb"][jnp.arange(S)][None, :, :]
           + params["type_emb"][segment_ids])
    emb2d = emb.reshape(B * S, H).astype(jnp.float32)

    ordered = (
        emb2d,
        params["gvecs"],
        params["wqkv"], params["bqkv"],
        params["wo"],
        params["w1"], params["b1"], params["w2"],
        params["lvecs"],
        params["wp"], params["wc"], params["bc"],
    )

    def full_spec(a):
        return pl.BlockSpec(a.shape, lambda b, vl, _nd=a.ndim: (0,) * _nd)

    in_specs = ([pl.BlockSpec((S, H), lambda b, vl: (b, 0))]      # per-batch tile
                + [full_spec(a) for a in ordered[1:]])            # weights: resident

    # advisory cost estimate so XLA schedules this call sensibly vs the gathers
    flops_b = (L * (2 * S * H * 3 * H            # fused QKV
                    + 2 * 2 * NH * S * S * DH    # scores + context
                    + 2 * S * H * H              # output proj
                    + 2 * 2 * S * H * FF)        # FFN
               + 2 * H * H + 2 * H * CP)         # pooler + classifier
    transc_b = L * (NH * S * S + S * FF) + H
    bytes_acc = int(sum(int(a.size) * a.dtype.itemsize for a in ordered)
                    + B * 4 + B * SP * CP * 4)
    cost = pl.CostEstimate(flops=int(B * flops_b),
                           transcendentals=int(B * transc_b),
                           bytes_accessed=bytes_acc)

    out_pad = pl.pallas_call(
        kobert_kernel,
        out_shape=jax.ShapeDtypeStruct((B, SP, CP), jnp.float32),
        grid_spec=pltpu.PrefetchScalarGridSpec(
            num_scalar_prefetch=1,                 # valid_length -> SMEM
            grid=(B,),
            in_specs=in_specs,
            out_specs=pl.BlockSpec((1, SP, CP), lambda b, vl: (b, 0, 0)),
        ),
        compiler_params=pltpu.CompilerParams(
            dimension_semantics=("parallel",),     # v7x: shard batch over both TCs
            vmem_limit_bytes=32 << 20,
        ),
        cost_estimate=cost,
    )(valid_length.astype(jnp.int32), *ordered)

    return out_pad[:, 0, :C]


if __name__ == "__main__":
    key = jax.random.PRNGKey(0)
    k_tok, k_seg, k_par = jax.random.split(key, 3)

    token_ids = jax.random.randint(k_tok, (B, S), 0, V, dtype=jnp.int32)
    segment_ids = jax.random.randint(k_seg, (B, S), 0, 2, dtype=jnp.int32)
    valid_length = jnp.array([5, 8], dtype=jnp.int32)   # mask[i, :valid_length[i]] = 1

    params = init_params(k_par)

    logits = kobert_classifier_forward(token_ids, valid_length, segment_ids, params)
    logits = jax.block_until_ready(logits)

    assert logits.shape == (B, C) and bool(jnp.all(jnp.isfinite(logits)))
    print("KERNEL_OK")
</pallas_src>

<mosaic_0001>
module attributes {stable_mosaic.version = 11 : i64} {
  func.func @kobert_kernel(%arg0: i32, %arg1: memref<2xi32, #tpu.memory_space<smem>>, %arg2: memref<8x32xf32, #tpu.memory_space<vmem>>, %arg3: memref<3x32xf32, #tpu.memory_space<vmem>>, %arg4: memref<2x32x96xbf16, #tpu.memory_space<vmem>>, %arg5: memref<2x1x96xf32, #tpu.memory_space<vmem>>, %arg6: memref<2x32x32xbf16, #tpu.memory_space<vmem>>, %arg7: memref<2x32x64xbf16, #tpu.memory_space<vmem>>, %arg8: memref<2x1x64xf32, #tpu.memory_space<vmem>>, %arg9: memref<2x64x32xbf16, #tpu.memory_space<vmem>>, %arg10: memref<2x6x32xf32, #tpu.memory_space<vmem>>, %arg11: memref<32x32xbf16, #tpu.memory_space<vmem>>, %arg12: memref<32x128xbf16, #tpu.memory_space<vmem>>, %arg13: memref<1x128xf32, #tpu.memory_space<vmem>>, %arg14: memref<1x8x128xf32, #tpu.memory_space<vmem>>) attributes {dimension_semantics = [#tpu.dimension_semantics<parallel>], iteration_bounds = array<i64: 2>, scalar_prefetch = 1 : i64, scratch_operands = 0 : i64, tpu.core_type = #tpu.core_type<tc>, window_params = [{transform_indices = @transform_0, window_bounds = array<i64: 8, 32>}, {pipeline_mode = #tpu.pipeline_mode<synchronous>, transform_indices = @transform_1, window_bounds = array<i64: 3, 32>}, {pipeline_mode = #tpu.pipeline_mode<synchronous>, transform_indices = @transform_2, window_bounds = array<i64: 2, 32, 96>}, {pipeline_mode = #tpu.pipeline_mode<synchronous>, transform_indices = @transform_3, window_bounds = array<i64: 2, 1, 96>}, {pipeline_mode = #tpu.pipeline_mode<synchronous>, transform_indices = @transform_4, window_bounds = array<i64: 2, 32, 32>}, {pipeline_mode = #tpu.pipeline_mode<synchronous>, transform_indices = @transform_5, window_bounds = array<i64: 2, 32, 64>}, {pipeline_mode = #tpu.pipeline_mode<synchronous>, transform_indices = @transform_6, window_bounds = array<i64: 2, 1, 64>}, {pipeline_mode = #tpu.pipeline_mode<synchronous>, transform_indices = @transform_7, window_bounds = array<i64: 2, 64, 32>}, {pipeline_mode = #tpu.pipeline_mode<synchronous>, transform_indices = @transform_8, window_bounds = array<i64: 2, 6, 32>}, {pipeline_mode = #tpu.pipeline_mode<synchronous>, transform_indices = @transform_9, window_bounds = array<i64: 32, 32>}, {pipeline_mode = #tpu.pipeline_mode<synchronous>, transform_indices = @transform_10, window_bounds = array<i64: 32, 128>}, {pipeline_mode = #tpu.pipeline_mode<synchronous>, transform_indices = @transform_11, window_bounds = array<i64: 1, 128>}, {transform_indices = @transform_12, window_bounds = array<i64: 1, 8, 128>}]} {
    %0 = tpu.iota {dimensions = array<i32: 1>} : vector<1x8xi32>
    %1 = arith.index_cast %arg0 : i32 to index
    %2 = memref.load %arg1[%1] : memref<2xi32, #tpu.memory_space<smem>>
    %3 = vector.broadcast %2 : i32 to vector<1x8xi32>
    %4 = arith.cmpi slt, %0, %3 : vector<1x8xi32>
    %cst = arith.constant 0.000000e+00 : f32
    %cst_0 = arith.constant -1.000000e+09 : f32
    %5 = vector.broadcast %cst : f32 to vector<1x8xf32>
    %6 = vector.broadcast %cst_0 : f32 to vector<1x8xf32>
    %7 = arith.select %4, %5, %6 : vector<1x8xi1>, vector<1x8xf32>
    %c0 = arith.constant 0 : index
    %c0_1 = arith.constant 0 : index
    %8 = vector.load %arg3[%c0, %c0_1] : memref<3x32xf32, #tpu.memory_space<vmem>>, vector<3x32xf32>
    %c0_2 = arith.constant 0 : index
    %c0_3 = arith.constant 0 : index
    %9 = vector.load %arg2[%c0_2, %c0_3] : memref<8x32xf32, #tpu.memory_space<vmem>>, vector<8x32xf32>
    %10 = vector.extract_strided_slice %8 {offsets = [0, 0], sizes = [1, 32], strides = [1, 1]} : vector<3x32xf32> to vector<1x32xf32>
    %11 = vector.extract_strided_slice %8 {offsets = [1, 0], sizes = [1, 32], strides = [1, 1]} : vector<3x32xf32> to vector<1x32xf32>
    %cst_4 = arith.constant dense<0.000000e+00> : vector<8xf32>
    %12 = vector.multi_reduction <add>, %9, %cst_4 [1] : vector<8x32xf32> to vector<8xf32>
    %13 = vector.shape_cast %12 : vector<8xf32> to vector<8x1xf32>
    %cst_5 = arith.constant 3.200000e+01 : f32
    %14 = vector.broadcast %cst_5 : f32 to vector<8x1xf32>
    %15 = arith.divf %13, %14 : vector<8x1xf32>
    %16 = vector.broadcast %15 : vector<8x1xf32> to vector<8x32xf32>
    %17 = arith.subf %9, %16 : vector<8x32xf32>
    %18 = arith.mulf %17, %17 : vector<8x32xf32>
    %cst_6 = arith.constant dense<0.000000e+00> : vector<8xf32>
    %19 = vector.multi_reduction <add>, %18, %cst_6 [1] : vector<8x32xf32> to vector<8xf32>
    %20 = vector.shape_cast %19 : vector<8xf32> to vector<8x1xf32>
    %cst_7 = arith.constant 3.200000e+01 : f32
    %21 = vector.broadcast %cst_7 : f32 to vector<8x1xf32>
    %22 = arith.divf %20, %21 : vector<8x1xf32>
    %23 = vector.broadcast %15 : vector<8x1xf32> to vector<8x32xf32>
    %24 = arith.subf %9, %23 : vector<8x32xf32>
    %cst_8 = arith.constant 9.99999996E-13 : f32
    %25 = vector.broadcast %cst_8 : f32 to vector<8x1xf32>
    %26 = arith.addf %22, %25 : vector<8x1xf32>
    %27 = math.rsqrt %26 : vector<8x1xf32>
    %28 = vector.broadcast %27 : vector<8x1xf32> to vector<8x32xf32>
    %29 = arith.mulf %24, %28 : vector<8x32xf32>
    %30 = vector.broadcast %10 : vector<1x32xf32> to vector<8x32xf32>
    %31 = arith.mulf %29, %30 : vector<8x32xf32>
    %32 = vector.broadcast %11 : vector<1x32xf32> to vector<8x32xf32>
    %33 = arith.addf %31, %32 : vector<8x32xf32>
    %c0_9 = arith.constant 0 : index
    %c0_10 = arith.constant 0 : index
    %c0_11 = arith.constant 0 : index
    %34 = vector.load %arg10[%c0_9, %c0_10, %c0_11] : memref<2x6x32xf32, #tpu.memory_space<vmem>>, vector<1x6x32xf32>
    %35 = vector.shape_cast %34 : vector<1x6x32xf32> to vector<6x32xf32>
    %36 = arith.truncf %33 : vector<8x32xf32> to vector<8x32xbf16>
    %c0_12 = arith.constant 0 : index
    %c0_13 = arith.constant 0 : index
    %c0_14 = arith.constant 0 : index
    %37 = vector.load %arg4[%c0_12, %c0_13, %c0_14] : memref<2x32x96xbf16, #tpu.memory_space<vmem>>, vector<1x32x96xbf16>
    %38 = vector.shape_cast %37 : vector<1x32x96xbf16> to vector<32x96xbf16>
    %cst_15 = arith.constant dense<0.000000e+00> : vector<8x96xf32>
    %39 = tpu.matmul %36, %38, %cst_15 {dimension_numbers = #tpu.dot_dimension_numbers<[1], [0], [0], [1], [0, 0, 1, 1], [], []>} : vector<8x32xbf16>, vector<32x96xbf16>, vector<8x96xf32> -> vector<8x96xf32>
    %c0_16 = arith.constant 0 : index
    %c0_17 = arith.constant 0 : index
    %c0_18 = arith.constant 0 : index
    %40 = vector.load %arg5[%c0_16, %c0_17, %c0_18] : memref<2x1x96xf32, #tpu.memory_space<vmem>>, vector<1x1x96xf32>
    %41 = vector.shape_cast %40 : vector<1x1x96xf32> to vector<1x96xf32>
    %42 = vector.broadcast %41 : vector<1x96xf32> to vector<8x96xf32>
    %43 = arith.addf %39, %42 : vector<8x96xf32>
    %44 = vector.extract_strided_slice %43 {offsets = [0, 0], sizes = [8, 16], strides = [1, 1]} : vector<8x96xf32> to vector<8x16xf32>
    %45 = vector.extract_strided_slice %43 {offsets = [0, 32], sizes = [8, 16], strides = [1, 1]} : vector<8x96xf32> to vector<8x16xf32>
    %46 = vector.extract_strided_slice %43 {offsets = [0, 64], sizes = [8, 16], strides = [1, 1]} : vector<8x96xf32> to vector<8x16xf32>
    %cst_19 = arith.constant dense<0.000000e+00> : vector<8x8xf32>
    %47 = tpu.matmul %44, %45, %cst_19 {dimension_numbers = #tpu.dot_dimension_numbers<[1], [1], [0], [0], [0, 0, 1, 0], [], []>} : vector<8x16xf32>, vector<8x16xf32>, vector<8x8xf32> -> vector<8x8xf32>
    %cst_20 = arith.constant 2.500000e-01 : f32
    %48 = vector.broadcast %cst_20 : f32 to vector<8x8xf32>
    %49 = arith.mulf %47, %48 : vector<8x8xf32>
    %50 = vector.broadcast %7 : vector<1x8xf32> to vector<8x8xf32>
    %51 = arith.addf %49, %50 : vector<8x8xf32>
    %cst_21 = arith.constant dense<0xFF800000> : vector<8xf32>
    %52 = vector.multi_reduction <maximumf>, %51, %cst_21 [1] : vector<8x8xf32> to vector<8xf32>
    %53 = vector.shape_cast %52 : vector<8xf32> to vector<8x1xf32>
    %54 = vector.broadcast %53 : vector<8x1xf32> to vector<8x8xf32>
    %55 = arith.subf %51, %54 : vector<8x8xf32>
    %56 = math.exp %55 : vector<8x8xf32>
    %cst_22 = arith.constant dense<0.000000e+00> : vector<8xf32>
    %57 = vector.multi_reduction <add>, %56, %cst_22 [1] : vector<8x8xf32> to vector<8xf32>
    %58 = vector.shape_cast %57 : vector<8xf32> to vector<8x1xf32>
    %59 = tpu.reciprocal %58 {approx = true} : vector<8x1xf32> -> vector<8x1xf32>
    %60 = vector.broadcast %59 : vector<8x1xf32> to vector<8x8xf32>
    %61 = arith.mulf %56, %60 : vector<8x8xf32>
    %cst_23 = arith.constant dense<0.000000e+00> : vector<8x16xf32>
    %62 = tpu.matmul %61, %46, %cst_23 {dimension_numbers = #tpu.dot_dimension_numbers<[1], [0], [0], [1], [0, 0, 1, 1], [], []>} : vector<8x8xf32>, vector<8x16xf32>, vector<8x16xf32> -> vector<8x16xf32>
    %63 = vector.extract_strided_slice %43 {offsets = [0, 16], sizes = [8, 16], strides = [1, 1]} : vector<8x96xf32> to vector<8x16xf32>
    %64 = vector.extract_strided_slice %43 {offsets = [0, 48], sizes = [8, 16], strides = [1, 1]} : vector<8x96xf32> to vector<8x16xf32>
    %65 = vector.extract_strided_slice %43 {offsets = [0, 80], sizes = [8, 16], strides = [1, 1]} : vector<8x96xf32> to vector<8x16xf32>
    %cst_24 = arith.constant dense<0.000000e+00> : vector<8x8xf32>
    %66 = tpu.matmul %63, %64, %cst_24 {dimension_numbers = #tpu.dot_dimension_numbers<[1], [1], [0], [0], [0, 0, 1, 0], [], []>} : vector<8x16xf32>, vector<8x16xf32>, vector<8x8xf32> -> vector<8x8xf32>
    %cst_25 = arith.constant 2.500000e-01 : f32
    %67 = vector.broadcast %cst_25 : f32 to vector<8x8xf32>
    %68 = arith.mulf %66, %67 : vector<8x8xf32>
    %69 = vector.broadcast %7 : vector<1x8xf32> to vector<8x8xf32>
    %70 = arith.addf %68, %69 : vector<8x8xf32>
    %cst_26 = arith.constant dense<0xFF800000> : vector<8xf32>
    %71 = vector.multi_reduction <maximumf>, %70, %cst_26 [1] : vector<8x8xf32> to vector<8xf32>
    %72 = vector.shape_cast %71 : vector<8xf32> to vector<8x1xf32>
    %73 = vector.broadcast %72 : vector<8x1xf32> to vector<8x8xf32>
    %74 = arith.subf %70, %73 : vector<8x8xf32>
    %75 = math.exp %74 : vector<8x8xf32>
    %cst_27 = arith.constant dense<0.000000e+00> : vector<8xf32>
    %76 = vector.multi_reduction <add>, %75, %cst_27 [1] : vector<8x8xf32> to vector<8xf32>
    %77 = vector.shape_cast %76 : vector<8xf32> to vector<8x1xf32>
    %78 = tpu.reciprocal %77 {approx = true} : vector<8x1xf32> -> vector<8x1xf32>
    %79 = vector.broadcast %78 : vector<8x1xf32> to vector<8x8xf32>
    %80 = arith.mulf %75, %79 : vector<8x8xf32>
    %cst_28 = arith.constant dense<0.000000e+00> : vector<8x16xf32>
    %81 = tpu.matmul %80, %65, %cst_28 {dimension_numbers = #tpu.dot_dimension_numbers<[1], [0], [0], [1], [0, 0, 1, 1], [], []>} : vector<8x8xf32>, vector<8x16xf32>, vector<8x16xf32> -> vector<8x16xf32>
    %82 = tpu.concatenate %62, %81 in 1 : vector<8x16xf32>, vector<8x16xf32> -> vector<8x32xf32>
    %83 = arith.truncf %82 : vector<8x32xf32> to vector<8x32xbf16>
    %c0_29 = arith.constant 0 : index
    %c0_30 = arith.constant 0 : index
    %c0_31 = arith.constant 0 : index
    %84 = vector.load %arg6[%c0_29, %c0_30, %c0_31] : memref<2x32x32xbf16, #tpu.memory_space<vmem>>, vector<1x32x32xbf16>
    %85 = vector.shape_cast %84 : vector<1x32x32xbf16> to vector<32x32xbf16>
    %cst_32 = arith.constant dense<0.000000e+00> : vector<8x32xf32>
    %86 = tpu.matmul %83, %85, %cst_32 {dimension_numbers = #tpu.dot_dimension_numbers<[1], [0], [0], [1], [0, 0, 1, 1], [], []>} : vector<8x32xbf16>, vector<32x32xbf16>, vector<8x32xf32> -> vector<8x32xf32>
    %87 = vector.extract_strided_slice %35 {offsets = [0, 0], sizes = [1, 32], strides = [1, 1]} : vector<6x32xf32> to vector<1x32xf32>
    %88 = vector.broadcast %87 : vector<1x32xf32> to vector<8x32xf32>
    %89 = arith.addf %86, %88 : vector<8x32xf32>
    %90 = arith.addf %33, %89 : vector<8x32xf32>
    %91 = vector.extract_strided_slice %35 {offsets = [1, 0], sizes = [1, 32], strides = [1, 1]} : vector<6x32xf32> to vector<1x32xf32>
    %92 = vector.extract_strided_slice %35 {offsets = [2, 0], sizes = [1, 32], strides = [1, 1]} : vector<6x32xf32> to vector<1x32xf32>
    %cst_33 = arith.constant dense<0.000000e+00> : vector<8xf32>
    %93 = vector.multi_reduction <add>, %90, %cst_33 [1] : vector<8x32xf32> to vector<8xf32>
    %94 = vector.shape_cast %93 : vector<8xf32> to vector<8x1xf32>
    %cst_34 = arith.constant 3.200000e+01 : f32
    %95 = vector.broadcast %cst_34 : f32 to vector<8x1xf32>
    %96 = arith.divf %94, %95 : vector<8x1xf32>
    %97 = vector.broadcast %96 : vector<8x1xf32> to vector<8x32xf32>
    %98 = arith.subf %90, %97 : vector<8x32xf32>
    %99 = arith.mulf %98, %98 : vector<8x32xf32>
    %cst_35 = arith.constant dense<0.000000e+00> : vector<8xf32>
    %100 = vector.multi_reduction <add>, %99, %cst_35 [1] : vector<8x32xf32> to vector<8xf32>
    %101 = vector.shape_cast %100 : vector<8xf32> to vector<8x1xf32>
    %cst_36 = arith.constant 3.200000e+01 : f32
    %102 = vector.broadcast %cst_36 : f32 to vector<8x1xf32>
    %103 = arith.divf %101, %102 : vector<8x1xf32>
    %104 = vector.broadcast %96 : vector<8x1xf32> to vector<8x32xf32>
    %105 = arith.subf %90, %104 : vector<8x32xf32>
    %cst_37 = arith.constant 9.99999996E-13 : f32
    %106 = vector.broadcast %cst_37 : f32 to vector<8x1xf32>
    %107 = arith.addf %103, %106 : vector<8x1xf32>
    %108 = math.rsqrt %107 : vector<8x1xf32>
    %109 = vector.broadcast %108 : vector<8x1xf32> to vector<8x32xf32>
    %110 = arith.mulf %105, %109 : vector<8x32xf32>
    %111 = vector.broadcast %91 : vector<1x32xf32> to vector<8x32xf32>
    %112 = arith.mulf %110, %111 : vector<8x32xf32>
    %113 = vector.broadcast %92 : vector<1x32xf32> to vector<8x32xf32>
    %114 = arith.addf %112, %113 : vector<8x32xf32>
    %115 = arith.truncf %114 : vector<8x32xf32> to vector<8x32xbf16>
    %c0_38 = arith.constant 0 : index
    %c0_39 = arith.constant 0 : index
    %c0_40 = arith.constant 0 : index
    %116 = vector.load %arg7[%c0_38, %c0_39, %c0_40] : memref<2x32x64xbf16, #tpu.memory_space<vmem>>, vector<1x32x64xbf16>
    %117 = vector.shape_cast %116 : vector<1x32x64xbf16> to vector<32x64xbf16>
    %cst_41 = arith.constant dense<0.000000e+00> : vector<8x64xf32>
    %118 = tpu.matmul %115, %117, %cst_41 {dimension_numbers = #tpu.dot_dimension_numbers<[1], [0], [0], [1], [0, 0, 1, 1], [], []>} : vector<8x32xbf16>, vector<32x64xbf16>, vector<8x64xf32> -> vector<8x64xf32>
    %c0_42 = arith.constant 0 : index
    %c0_43 = arith.constant 0 : index
    %c0_44 = arith.constant 0 : index
    %119 = vector.load %arg8[%c0_42, %c0_43, %c0_44] : memref<2x1x64xf32, #tpu.memory_space<vmem>>, vector<1x1x64xf32>
    %120 = vector.shape_cast %119 : vector<1x1x64xf32> to vector<1x64xf32>
    %121 = vector.broadcast %120 : vector<1x64xf32> to vector<8x64xf32>
    %122 = arith.addf %118, %121 : vector<8x64xf32>
    %cst_45 = arith.constant 5.000000e-01 : f32
    %123 = vector.broadcast %cst_45 : f32 to vector<8x64xf32>
    %124 = arith.mulf %123, %122 : vector<8x64xf32>
    %cst_46 = arith.constant 4.471500e-02 : f32
    %125 = vector.broadcast %cst_46 : f32 to vector<8x64xf32>
    %126 = arith.mulf %125, %122 : vector<8x64xf32>
    %127 = arith.mulf %126, %122 : vector<8x64xf32>
    %128 = arith.mulf %127, %122 : vector<8x64xf32>
    %129 = arith.addf %122, %128 : vector<8x64xf32>
    %cst_47 = arith.constant 0.797884583 : f32
    %130 = vector.broadcast %cst_47 : f32 to vector<8x64xf32>
    %131 = arith.mulf %130, %129 : vector<8x64xf32>
    %132 = math.tanh %131 : vector<8x64xf32>
    %cst_48 = arith.constant 1.000000e+00 : f32
    %133 = vector.broadcast %cst_48 : f32 to vector<8x64xf32>
    %134 = arith.addf %133, %132 : vector<8x64xf32>
    %135 = arith.mulf %124, %134 : vector<8x64xf32>
    %136 = arith.truncf %135 : vector<8x64xf32> to vector<8x64xbf16>
    %c0_49 = arith.constant 0 : index
    %c0_50 = arith.constant 0 : index
    %c0_51 = arith.constant 0 : index
    %137 = vector.load %arg9[%c0_49, %c0_50, %c0_51] : memref<2x64x32xbf16, #tpu.memory_space<vmem>>, vector<1x64x32xbf16>
    %138 = vector.shape_cast %137 : vector<1x64x32xbf16> to vector<64x32xbf16>
    %cst_52 = arith.constant dense<0.000000e+00> : vector<8x32xf32>
    %139 = tpu.matmul %136, %138, %cst_52 {dimension_numbers = #tpu.dot_dimension_numbers<[1], [0], [0], [1], [0, 0, 1, 1], [], []>} : vector<8x64xbf16>, vector<64x32xbf16>, vector<8x32xf32> -> vector<8x32xf32>
    %140 = vector.extract_strided_slice %35 {offsets = [3, 0], sizes = [1, 32], strides = [1, 1]} : vector<6x32xf32> to vector<1x32xf32>
    %141 = vector.broadcast %140 : vector<1x32xf32> to vector<8x32xf32>
    %142 = arith.addf %139, %141 : vector<8x32xf32>
    %143 = arith.addf %114, %142 : vector<8x32xf32>
    %144 = vector.extract_strided_slice %35 {offsets = [4, 0], sizes = [1, 32], strides = [1, 1]} : vector<6x32xf32> to vector<1x32xf32>
    %145 = vector.extract_strided_slice %35 {offsets = [5, 0], sizes = [1, 32], strides = [1, 1]} : vector<6x32xf32> to vector<1x32xf32>
    %cst_53 = arith.constant dense<0.000000e+00> : vector<8xf32>
    %146 = vector.multi_reduction <add>, %143, %cst_53 [1] : vector<8x32xf32> to vector<8xf32>
    %147 = vector.shape_cast %146 : vector<8xf32> to vector<8x1xf32>
    %cst_54 = arith.constant 3.200000e+01 : f32
    %148 = vector.broadcast %cst_54 : f32 to vector<8x1xf32>
    %149 = arith.divf %147, %148 : vector<8x1xf32>
    %150 = vector.broadcast %149 : vector<8x1xf32> to vector<8x32xf32>
    %151 = arith.subf %143, %150 : vector<8x32xf32>
    %152 = arith.mulf %151, %151 : vector<8x32xf32>
    %cst_55 = arith.constant dense<0.000000e+00> : vector<8xf32>
    %153 = vector.multi_reduction <add>, %152, %cst_55 [1] : vector<8x32xf32> to vector<8xf32>
    %154 = vector.shape_cast %153 : vector<8xf32> to vector<8x1xf32>
    %cst_56 = arith.constant 3.200000e+01 : f32
    %155 = vector.broadcast %cst_56 : f32 to vector<8x1xf32>
    %156 = arith.divf %154, %155 : vector<8x1xf32>
    %157 = vector.broadcast %149 : vector<8x1xf32> to vector<8x32xf32>
    %158 = arith.subf %143, %157 : vector<8x32xf32>
    %cst_57 = arith.constant 9.99999996E-13 : f32
    %159 = vector.broadcast %cst_57 : f32 to vector<8x1xf32>
    %160 = arith.addf %156, %159 : vector<8x1xf32>
    %161 = math.rsqrt %160 : vector<8x1xf32>
    %162 = vector.broadcast %161 : vector<8x1xf32> to vector<8x32xf32>
    %163 = arith.mulf %158, %162 : vector<8x32xf32>
    %164 = vector.broadcast %144 : vector<1x32xf32> to vector<8x32xf32>
    %165 = arith.mulf %163, %164 : vector<8x32xf32>
    %166 = vector.broadcast %145 : vector<1x32xf32> to vector<8x32xf32>
    %167 = arith.addf %165, %166 : vector<8x32xf32>
    %c1 = arith.constant 1 : index
    %c0_58 = arith.constant 0 : index
    %c0_59 = arith.constant 0 : index
    %168 = vector.load %arg10[%c1, %c0_58, %c0_59] : memref<2x6x32xf32, #tpu.memory_space<vmem>>, vector<1x6x32xf32>
    %169 = vector.shape_cast %168 : vector<1x6x32xf32> to vector<6x32xf32>
    %170 = arith.truncf %167 : vector<8x32xf32> to vector<8x32xbf16>
    %c1_60 = arith.constant 1 : index
    %c0_61 = arith.constant 0 : index
    %c0_62 = arith.constant 0 : index
    %171 = vector.load %arg4[%c1_60, %c0_61, %c0_62] : memref<2x32x96xbf16, #tpu.memory_space<vmem>>, vector<1x32x96xbf16>
    %172 = vector.shape_cast %171 : vector<1x32x96xbf16> to vector<32x96xbf16>
    %cst_63 = arith.constant dense<0.000000e+00> : vector<8x96xf32>
    %173 = tpu.matmul %170, %172, %cst_63 {dimension_numbers = #tpu.dot_dimension_numbers<[1], [0], [0], [1], [0, 0, 1, 1], [], []>} : vector<8x32xbf16>, vector<32x96xbf16>, vector<8x96xf32> -> vector<8x96xf32>
    %c1_64 = arith.constant 1 : index
    %c0_65 = arith.constant 0 : index
    %c0_66 = arith.constant 0 : index
    %174 = vector.load %arg5[%c1_64, %c0_65, %c0_66] : memref<2x1x96xf32, #tpu.memory_space<vmem>>, vector<1x1x96xf32>
    %175 = vector.shape_cast %174 : vector<1x1x96xf32> to vector<1x96xf32>
    %176 = vector.broadcast %175 : vector<1x96xf32> to vector<8x96xf32>
    %177 = arith.addf %173, %176 : vector<8x96xf32>
    %178 = vector.extract_strided_slice %177 {offsets = [0, 0], sizes = [8, 16], strides = [1, 1]} : vector<8x96xf32> to vector<8x16xf32>
    %179 = vector.extract_strided_slice %177 {offsets = [0, 32], sizes = [8, 16], strides = [1, 1]} : vector<8x96xf32> to vector<8x16xf32>
    %180 = vector.extract_strided_slice %177 {offsets = [0, 64], sizes = [8, 16], strides = [1, 1]} : vector<8x96xf32> to vector<8x16xf32>
    %cst_67 = arith.constant dense<0.000000e+00> : vector<8x8xf32>
    %181 = tpu.matmul %178, %179, %cst_67 {dimension_numbers = #tpu.dot_dimension_numbers<[1], [1], [0], [0], [0, 0, 1, 0], [], []>} : vector<8x16xf32>, vector<8x16xf32>, vector<8x8xf32> -> vector<8x8xf32>
    %cst_68 = arith.constant 2.500000e-01 : f32
    %182 = vector.broadcast %cst_68 : f32 to vector<8x8xf32>
    %183 = arith.mulf %181, %182 : vector<8x8xf32>
    %184 = vector.broadcast %7 : vector<1x8xf32> to vector<8x8xf32>
    %185 = arith.addf %183, %184 : vector<8x8xf32>
    %cst_69 = arith.constant dense<0xFF800000> : vector<8xf32>
    %186 = vector.multi_reduction <maximumf>, %185, %cst_69 [1] : vector<8x8xf32> to vector<8xf32>
    %187 = vector.shape_cast %186 : vector<8xf32> to vector<8x1xf32>
    %188 = vector.broadcast %187 : vector<8x1xf32> to vector<8x8xf32>
    %189 = arith.subf %185, %188 : vector<8x8xf32>
    %190 = math.exp %189 : vector<8x8xf32>
    %cst_70 = arith.constant dense<0.000000e+00> : vector<8xf32>
    %191 = vector.multi_reduction <add>, %190, %cst_70 [1] : vector<8x8xf32> to vector<8xf32>
    %192 = vector.shape_cast %191 : vector<8xf32> to vector<8x1xf32>
    %193 = tpu.reciprocal %192 {approx = true} : vector<8x1xf32> -> vector<8x1xf32>
    %194 = vector.broadcast %193 : vector<8x1xf32> to vector<8x8xf32>
    %195 = arith.mulf %190, %194 : vector<8x8xf32>
    %cst_71 = arith.constant dense<0.000000e+00> : vector<8x16xf32>
    %196 = tpu.matmul %195, %180, %cst_71 {dimension_numbers = #tpu.dot_dimension_numbers<[1], [0], [0], [1], [0, 0, 1, 1], [], []>} : vector<8x8xf32>, vector<8x16xf32>, vector<8x16xf32> -> vector<8x16xf32>
    %197 = vector.extract_strided_slice %177 {offsets = [0, 16], sizes = [8, 16], strides = [1, 1]} : vector<8x96xf32> to vector<8x16xf32>
    %198 = vector.extract_strided_slice %177 {offsets = [0, 48], sizes = [8, 16], strides = [1, 1]} : vector<8x96xf32> to vector<8x16xf32>
    %199 = vector.extract_strided_slice %177 {offsets = [0, 80], sizes = [8, 16], strides = [1, 1]} : vector<8x96xf32> to vector<8x16xf32>
    %cst_72 = arith.constant dense<0.000000e+00> : vector<8x8xf32>
    %200 = tpu.matmul %197, %198, %cst_72 {dimension_numbers = #tpu.dot_dimension_numbers<[1], [1], [0], [0], [0, 0, 1, 0], [], []>} : vector<8x16xf32>, vector<8x16xf32>, vector<8x8xf32> -> vector<8x8xf32>
    %cst_73 = arith.constant 2.500000e-01 : f32
    %201 = vector.broadcast %cst_73 : f32 to vector<8x8xf32>
    %202 = arith.mulf %200, %201 : vector<8x8xf32>
    %203 = vector.broadcast %7 : vector<1x8xf32> to vector<8x8xf32>
    %204 = arith.addf %202, %203 : vector<8x8xf32>
    %cst_74 = arith.constant dense<0xFF800000> : vector<8xf32>
    %205 = vector.multi_reduction <maximumf>, %204, %cst_74 [1] : vector<8x8xf32> to vector<8xf32>
    %206 = vector.shape_cast %205 : vector<8xf32> to vector<8x1xf32>
    %207 = vector.broadcast %206 : vector<8x1xf32> to vector<8x8xf32>
    %208 = arith.subf %204, %207 : vector<8x8xf32>
    %209 = math.exp %208 : vector<8x8xf32>
    %cst_75 = arith.constant dense<0.000000e+00> : vector<8xf32>
    %210 = vector.multi_reduction <add>, %209, %cst_75 [1] : vector<8x8xf32> to vector<8xf32>
    %211 = vector.shape_cast %210 : vector<8xf32> to vector<8x1xf32>
    %212 = tpu.reciprocal %211 {approx = true} : vector<8x1xf32> -> vector<8x1xf32>
    %213 = vector.broadcast %212 : vector<8x1xf32> to vector<8x8xf32>
    %214 = arith.mulf %209, %213 : vector<8x8xf32>
    %cst_76 = arith.constant dense<0.000000e+00> : vector<8x16xf32>
    %215 = tpu.matmul %214, %199, %cst_76 {dimension_numbers = #tpu.dot_dimension_numbers<[1], [0], [0], [1], [0, 0, 1, 1], [], []>} : vector<8x8xf32>, vector<8x16xf32>, vector<8x16xf32> -> vector<8x16xf32>
    %216 = tpu.concatenate %196, %215 in 1 : vector<8x16xf32>, vector<8x16xf32> -> vector<8x32xf32>
    %217 = arith.truncf %216 : vector<8x32xf32> to vector<8x32xbf16>
    %c1_77 = arith.constant 1 : index
    %c0_78 = arith.constant 0 : index
    %c0_79 = arith.constant 0 : index
    %218 = vector.load %arg6[%c1_77, %c0_78, %c0_79] : memref<2x32x32xbf16, #tpu.memory_space<vmem>>, vector<1x32x32xbf16>
    %219 = vector.shape_cast %218 : vector<1x32x32xbf16> to vector<32x32xbf16>
    %cst_80 = arith.constant dense<0.000000e+00> : vector<8x32xf32>
    %220 = tpu.matmul %217, %219, %cst_80 {dimension_numbers = #tpu.dot_dimension_numbers<[1], [0], [0], [1], [0, 0, 1, 1], [], []>} : vector<8x32xbf16>, vector<32x32xbf16>, vector<8x32xf32> -> vector<8x32xf32>
    %221 = vector.extract_strided_slice %169 {offsets = [0, 0], sizes = [1, 32], strides = [1, 1]} : vector<6x32xf32> to vector<1x32xf32>
    %222 = vector.broadcast %221 : vector<1x32xf32> to vector<8x32xf32>
    %223 = arith.addf %220, %222 : vector<8x32xf32>
    %224 = arith.addf %167, %223 : vector<8x32xf32>
    %225 = vector.extract_strided_slice %169 {offsets = [1, 0], sizes = [1, 32], strides = [1, 1]} : vector<6x32xf32> to vector<1x32xf32>
    %226 = vector.extract_strided_slice %169 {offsets = [2, 0], sizes = [1, 32], strides = [1, 1]} : vector<6x32xf32> to vector<1x32xf32>
    %cst_81 = arith.constant dense<0.000000e+00> : vector<8xf32>
    %227 = vector.multi_reduction <add>, %224, %cst_81 [1] : vector<8x32xf32> to vector<8xf32>
    %228 = vector.shape_cast %227 : vector<8xf32> to vector<8x1xf32>
    %cst_82 = arith.constant 3.200000e+01 : f32
    %229 = vector.broadcast %cst_82 : f32 to vector<8x1xf32>
    %230 = arith.divf %228, %229 : vector<8x1xf32>
    %231 = vector.broadcast %230 : vector<8x1xf32> to vector<8x32xf32>
    %232 = arith.subf %224, %231 : vector<8x32xf32>
    %233 = arith.mulf %232, %232 : vector<8x32xf32>
    %cst_83 = arith.constant dense<0.000000e+00> : vector<8xf32>
    %234 = vector.multi_reduction <add>, %233, %cst_83 [1] : vector<8x32xf32> to vector<8xf32>
    %235 = vector.shape_cast %234 : vector<8xf32> to vector<8x1xf32>
    %cst_84 = arith.constant 3.200000e+01 : f32
    %236 = vector.broadcast %cst_84 : f32 to vector<8x1xf32>
    %237 = arith.divf %235, %236 : vector<8x1xf32>
    %238 = vector.broadcast %230 : vector<8x1xf32> to vector<8x32xf32>
    %239 = arith.subf %224, %238 : vector<8x32xf32>
    %cst_85 = arith.constant 9.99999996E-13 : f32
    %240 = vector.broadcast %cst_85 : f32 to vector<8x1xf32>
    %241 = arith.addf %237, %240 : vector<8x1xf32>
    %242 = math.rsqrt %241 : vector<8x1xf32>
    %243 = vector.broadcast %242 : vector<8x1xf32> to vector<8x32xf32>
    %244 = arith.mulf %239, %243 : vector<8x32xf32>
    %245 = vector.broadcast %225 : vector<1x32xf32> to vector<8x32xf32>
    %246 = arith.mulf %244, %245 : vector<8x32xf32>
    %247 = vector.broadcast %226 : vector<1x32xf32> to vector<8x32xf32>
    %248 = arith.addf %246, %247 : vector<8x32xf32>
    %249 = arith.truncf %248 : vector<8x32xf32> to vector<8x32xbf16>
    %c1_86 = arith.constant 1 : index
    %c0_87 = arith.constant 0 : index
    %c0_88 = arith.constant 0 : index
    %250 = vector.load %arg7[%c1_86, %c0_87, %c0_88] : memref<2x32x64xbf16, #tpu.memory_space<vmem>>, vector<1x32x64xbf16>
    %251 = vector.shape_cast %250 : vector<1x32x64xbf16> to vector<32x64xbf16>
    %cst_89 = arith.constant dense<0.000000e+00> : vector<8x64xf32>
    %252 = tpu.matmul %249, %251, %cst_89 {dimension_numbers = #tpu.dot_dimension_numbers<[1], [0], [0], [1], [0, 0, 1, 1], [], []>} : vector<8x32xbf16>, vector<32x64xbf16>, vector<8x64xf32> -> vector<8x64xf32>
    %c1_90 = arith.constant 1 : index
    %c0_91 = arith.constant 0 : index
    %c0_92 = arith.constant 0 : index
    %253 = vector.load %arg8[%c1_90, %c0_91, %c0_92] : memref<2x1x64xf32, #tpu.memory_space<vmem>>, vector<1x1x64xf32>
    %254 = vector.shape_cast %253 : vector<1x1x64xf32> to vector<1x64xf32>
    %255 = vector.broadcast %254 : vector<1x64xf32> to vector<8x64xf32>
    %256 = arith.addf %252, %255 : vector<8x64xf32>
    %cst_93 = arith.constant 5.000000e-01 : f32
    %257 = vector.broadcast %cst_93 : f32 to vector<8x64xf32>
    %258 = arith.mulf %257, %256 : vector<8x64xf32>
    %cst_94 = arith.constant 4.471500e-02 : f32
    %259 = vector.broadcast %cst_94 : f32 to vector<8x64xf32>
    %260 = arith.mulf %259, %256 : vector<8x64xf32>
    %261 = arith.mulf %260, %256 : vector<8x64xf32>
    %262 = arith.mulf %261, %256 : vector<8x64xf32>
    %263 = arith.addf %256, %262 : vector<8x64xf32>
    %cst_95 = arith.constant 0.797884583 : f32
    %264 = vector.broadcast %cst_95 : f32 to vector<8x64xf32>
    %265 = arith.mulf %264, %263 : vector<8x64xf32>
    %266 = math.tanh %265 : vector<8x64xf32>
    %cst_96 = arith.constant 1.000000e+00 : f32
    %267 = vector.broadcast %cst_96 : f32 to vector<8x64xf32>
    %268 = arith.addf %267, %266 : vector<8x64xf32>
    %269 = arith.mulf %258, %268 : vector<8x64xf32>
    %270 = arith.truncf %269 : vector<8x64xf32> to vector<8x64xbf16>
    %c1_97 = arith.constant 1 : index
    %c0_98 = arith.constant 0 : index
    %c0_99 = arith.constant 0 : index
    %271 = vector.load %arg9[%c1_97, %c0_98, %c0_99] : memref<2x64x32xbf16, #tpu.memory_space<vmem>>, vector<1x64x32xbf16>
    %272 = vector.shape_cast %271 : vector<1x64x32xbf16> to vector<64x32xbf16>
    %cst_100 = arith.constant dense<0.000000e+00> : vector<8x32xf32>
    %273 = tpu.matmul %270, %272, %cst_100 {dimension_numbers = #tpu.dot_dimension_numbers<[1], [0], [0], [1], [0, 0, 1, 1], [], []>} : vector<8x64xbf16>, vector<64x32xbf16>, vector<8x32xf32> -> vector<8x32xf32>
    %274 = vector.extract_strided_slice %169 {offsets = [3, 0], sizes = [1, 32], strides = [1, 1]} : vector<6x32xf32> to vector<1x32xf32>
    %275 = vector.broadcast %274 : vector<1x32xf32> to vector<8x32xf32>
    %276 = arith.addf %273, %275 : vector<8x32xf32>
    %277 = arith.addf %248, %276 : vector<8x32xf32>
    %278 = vector.extract_strided_slice %169 {offsets = [4, 0], sizes = [1, 32], strides = [1, 1]} : vector<6x32xf32> to vector<1x32xf32>
    %279 = vector.extract_strided_slice %169 {offsets = [5, 0], sizes = [1, 32], strides = [1, 1]} : vector<6x32xf32> to vector<1x32xf32>
    %cst_101 = arith.constant dense<0.000000e+00> : vector<8xf32>
    %280 = vector.multi_reduction <add>, %277, %cst_101 [1] : vector<8x32xf32> to vector<8xf32>
    %281 = vector.shape_cast %280 : vector<8xf32> to vector<8x1xf32>
    %cst_102 = arith.constant 3.200000e+01 : f32
    %282 = vector.broadcast %cst_102 : f32 to vector<8x1xf32>
    %283 = arith.divf %281, %282 : vector<8x1xf32>
    %284 = vector.broadcast %283 : vector<8x1xf32> to vector<8x32xf32>
    %285 = arith.subf %277, %284 : vector<8x32xf32>
    %286 = arith.mulf %285, %285 : vector<8x32xf32>
    %cst_103 = arith.constant dense<0.000000e+00> : vector<8xf32>
    %287 = vector.multi_reduction <add>, %286, %cst_103 [1] : vector<8x32xf32> to vector<8xf32>
    %288 = vector.shape_cast %287 : vector<8xf32> to vector<8x1xf32>
    %cst_104 = arith.constant 3.200000e+01 : f32
    %289 = vector.broadcast %cst_104 : f32 to vector<8x1xf32>
    %290 = arith.divf %288, %289 : vector<8x1xf32>
    %291 = vector.broadcast %283 : vector<8x1xf32> to vector<8x32xf32>
    %292 = arith.subf %277, %291 : vector<8x32xf32>
    %cst_105 = arith.constant 9.99999996E-13 : f32
    %293 = vector.broadcast %cst_105 : f32 to vector<8x1xf32>
    %294 = arith.addf %290, %293 : vector<8x1xf32>
    %295 = math.rsqrt %294 : vector<8x1xf32>
    %296 = vector.broadcast %295 : vector<8x1xf32> to vector<8x32xf32>
    %297 = arith.mulf %292, %296 : vector<8x32xf32>
    %298 = vector.broadcast %278 : vector<1x32xf32> to vector<8x32xf32>
    %299 = arith.mulf %297, %298 : vector<8x32xf32>
    %300 = vector.broadcast %279 : vector<1x32xf32> to vector<8x32xf32>
    %301 = arith.addf %299, %300 : vector<8x32xf32>
    %302 = vector.extract_strided_slice %301 {offsets = [0, 0], sizes = [1, 32], strides = [1, 1]} : vector<8x32xf32> to vector<1x32xf32>
    %303 = arith.truncf %302 : vector<1x32xf32> to vector<1x32xbf16>
    %c0_106 = arith.constant 0 : index
    %c0_107 = arith.constant 0 : index
    %304 = vector.load %arg11[%c0_106, %c0_107] : memref<32x32xbf16, #tpu.memory_space<vmem>>, vector<32x32xbf16>
    %cst_108 = arith.constant dense<0.000000e+00> : vector<1x32xf32>
    %305 = tpu.matmul %303, %304, %cst_108 {dimension_numbers = #tpu.dot_dimension_numbers<[1], [0], [0], [1], [0, 0, 1, 1], [], []>} : vector<1x32xbf16>, vector<32x32xbf16>, vector<1x32xf32> -> vector<1x32xf32>
    %306 = vector.extract_strided_slice %8 {offsets = [2, 0], sizes = [1, 32], strides = [1, 1]} : vector<3x32xf32> to vector<1x32xf32>
    %307 = arith.addf %305, %306 : vector<1x32xf32>
    %308 = math.tanh %307 : vector<1x32xf32>
    %309 = arith.truncf %308 : vector<1x32xf32> to vector<1x32xbf16>
    %c0_109 = arith.constant 0 : index
    %c0_110 = arith.constant 0 : index
    %310 = vector.load %arg12[%c0_109, %c0_110] : memref<32x128xbf16, #tpu.memory_space<vmem>>, vector<32x128xbf16>
    %cst_111 = arith.constant dense<0.000000e+00> : vector<1x128xf32>
    %311 = tpu.matmul %309, %310, %cst_111 {dimension_numbers = #tpu.dot_dimension_numbers<[1], [0], [0], [1], [0, 0, 1, 1], [], []>} : vector<1x32xbf16>, vector<32x128xbf16>, vector<1x128xf32> -> vector<1x128xf32>
    %c0_112 = arith.constant 0 : index
    %c0_113 = arith.constant 0 : index
    %312 = vector.load %arg13[%c0_112, %c0_113] : memref<1x128xf32, #tpu.memory_space<vmem>>, vector<1x128xf32>
    %313 = arith.addf %311, %312 : vector<1x128xf32>
    %314 = vector.shape_cast %313 : vector<1x128xf32> to vector<1x1x128xf32>
    %315 = vector.shape_cast %314 : vector<1x1x128xf32> to vector<1x1x128xf32>
    %316 = vector.broadcast %315 : vector<1x1x128xf32> to vector<1x8x128xf32>
    %c0_114 = arith.constant 0 : index
    %c0_115 = arith.constant 0 : index
    %c0_116 = arith.constant 0 : index
    %317 = vector.load %arg14[%c0_114, %c0_115, %c0_116] : memref<1x8x128xf32, #tpu.memory_space<vmem>>, vector<1x8x128xf32>
    tpu.vector_store %arg14[%c0_114, %c0_115, %c0_116], %316 {strides = array<i32>} : memref<1x8x128xf32, #tpu.memory_space<vmem>>, vector<1x8x128xf32>,
    return
  }
  func.func @transform_0(%arg0: i32, %arg1: memref<2xi32, #tpu.memory_space<smem>>) -> (i32, i32) {
    %c0_i32 = arith.constant 0 : i32
    %c0_i32_0 = arith.constant 0 : i32
    return %arg0, %c0_i32 : i32, i32
  }
  func.func @transform_1(%arg0: i32, %arg1: memref<2xi32, #tpu.memory_space<smem>>) -> (i32, i32) {
    %c0_i32 = arith.constant 0 : i32
    %c0_i32_0 = arith.constant 0 : i32
    %c0_i32_1 = arith.constant 0 : i32
    return %c0_i32, %c0_i32_0 : i32, i32
  }
  func.func @transform_2(%arg0: i32, %arg1: memref<2xi32, #tpu.memory_space<smem>>) -> (i32, i32, i32) {
    %c0_i32 = arith.constant 0 : i32
    %c0_i32_0 = arith.constant 0 : i32
    %c0_i32_1 = arith.constant 0 : i32
    %c0_i32_2 = arith.constant 0 : i32
    return %c0_i32, %c0_i32_0, %c0_i32_1 : i32, i32, i32
  }
  func.func @transform_3(%arg0: i32, %arg1: memref<2xi32, #tpu.memory_space<smem>>) -> (i32, i32, i32) {
    %c0_i32 = arith.constant 0 : i32
    %c0_i32_0 = arith.constant 0 : i32
    %c0_i32_1 = arith.constant 0 : i32
    %c0_i32_2 = arith.constant 0 : i32
    return %c0_i32, %c0_i32_0, %c0_i32_1 : i32, i32, i32
  }
  func.func @transform_4(%arg0: i32, %arg1: memref<2xi32, #tpu.memory_space<smem>>) -> (i32, i32, i32) {
    %c0_i32 = arith.constant 0 : i32
    %c0_i32_0 = arith.constant 0 : i32
    %c0_i32_1 = arith.constant 0 : i32
    %c0_i32_2 = arith.constant 0 : i32
    return %c0_i32, %c0_i32_0, %c0_i32_1 : i32, i32, i32
  }
  func.func @transform_5(%arg0: i32, %arg1: memref<2xi32, #tpu.memory_space<smem>>) -> (i32, i32, i32) {
    %c0_i32 = arith.constant 0 : i32
    %c0_i32_0 = arith.constant 0 : i32
    %c0_i32_1 = arith.constant 0 : i32
    %c0_i32_2 = arith.constant 0 : i32
    return %c0_i32, %c0_i32_0, %c0_i32_1 : i32, i32, i32
  }
  func.func @transform_6(%arg0: i32, %arg1: memref<2xi32, #tpu.memory_space<smem>>) -> (i32, i32, i32) {
    %c0_i32 = arith.constant 0 : i32
    %c0_i32_0 = arith.constant 0 : i32
    %c0_i32_1 = arith.constant 0 : i32
    %c0_i32_2 = arith.constant 0 : i32
    return %c0_i32, %c0_i32_0, %c0_i32_1 : i32, i32, i32
  }
  func.func @transform_7(%arg0: i32, %arg1: memref<2xi32, #tpu.memory_space<smem>>) -> (i32, i32, i32) {
    %c0_i32 = arith.constant 0 : i32
    %c0_i32_0 = arith.constant 0 : i32
    %c0_i32_1 = arith.constant 0 : i32
    %c0_i32_2 = arith.constant 0 : i32
    return %c0_i32, %c0_i32_0, %c0_i32_1 : i32, i32, i32
  }
  func.func @transform_8(%arg0: i32, %arg1: memref<2xi32, #tpu.memory_space<smem>>) -> (i32, i32, i32) {
    %c0_i32 = arith.constant 0 : i32
    %c0_i32_0 = arith.constant 0 : i32
    %c0_i32_1 = arith.constant 0 : i32
    %c0_i32_2 = arith.constant 0 : i32
    return %c0_i32, %c0_i32_0, %c0_i32_1 : i32, i32, i32
  }
  func.func @transform_9(%arg0: i32, %arg1: memref<2xi32, #tpu.memory_space<smem>>) -> (i32, i32) {
    %c0_i32 = arith.constant 0 : i32
    %c0_i32_0 = arith.constant 0 : i32
    %c0_i32_1 = arith.constant 0 : i32
    return %c0_i32, %c0_i32_0 : i32, i32
  }
  func.func @transform_10(%arg0: i32, %arg1: memref<2xi32, #tpu.memory_space<smem>>) -> (i32, i32) {
    %c0_i32 = arith.constant 0 : i32
    %c0_i32_0 = arith.constant 0 : i32
    %c0_i32_1 = arith.constant 0 : i32
    return %c0_i32, %c0_i32_0 : i32, i32
  }
  func.func @transform_11(%arg0: i32, %arg1: memref<2xi32, #tpu.memory_space<smem>>) -> (i32, i32) {
    %c0_i32 = arith.constant 0 : i32
    %c0_i32_0 = arith.constant 0 : i32
    %c0_i32_1 = arith.constant 0 : i32
    return %c0_i32, %c0_i32_0 : i32, i32
  }
  func.func @transform_12(%arg0: i32, %arg1: memref<2xi32, #tpu.memory_space<smem>>) -> (i32, i32, i32) {
    %c0_i32 = arith.constant 0 : i32
    %c0_i32_0 = arith.constant 0 : i32
    %c0_i32_1 = arith.constant 0 : i32
    return %arg0, %c0_i32, %c0_i32_0 : i32, i32, i32
  }
}

</mosaic_0001>

<llo_original>
// kernel: kobert_classifier_forward.1
$region0: #{kobert_classifier_forward.1}
  #allocation0 [shape = 'u32[]', space=smem, size = 0x4, offset = 0x4, fixed_abs, tag = 'smem constant byte address 0x4 - core index']
  #allocation1 [shape = 'u32[144,128]{1,0:T(1,128)}', space=vmem, size = 0x12000, scoped, tag = 'internal scratch']
  #allocation2 [shape = 's32[1]{0}', space=sflag, size = 0x4, scoped, tag = 'scoped memory for kobert_classifier_forward.1']
  #allocation3 [shape = 'u8[512]{0}', space=smem, size = 0x200, scoped, tag = 'prefetched SMEM operand 0']
  %s0 = inlined_call_operand.vmem [shape: s32[2], index: 0, kind: input, shape index: {}]
  %s1 = inlined_call_operand.vmem [shape: f32[16,32], index: 1, kind: input, shape index: {}]
  %s2 = inlined_call_operand.vmem [shape: f32[3,32], index: 2, kind: input, shape index: {}]
  %s3 = inlined_call_operand.vmem [shape: bf16[2,32,96], index: 3, kind: input, shape index: {}]
  %s4 = inlined_call_operand.vmem [shape: f32[2,1,96], index: 4, kind: input, shape index: {}]
  %s5 = inlined_call_operand.vmem [shape: bf16[2,32,32], index: 5, kind: input, shape index: {}]
  %s6 = inlined_call_operand.vmem [shape: bf16[2,32,64], index: 6, kind: input, shape index: {}]
  %s7 = inlined_call_operand.vmem [shape: f32[2,1,64], index: 7, kind: input, shape index: {}]
  %s8 = inlined_call_operand.vmem [shape: bf16[2,64,32], index: 8, kind: input, shape index: {}]
  %s9 = inlined_call_operand.vmem [shape: f32[2,6,32], index: 9, kind: input, shape index: {}]
  %s10 = inlined_call_operand.vmem [shape: bf16[32,32], index: 10, kind: input, shape index: {}]
  %s11 = inlined_call_operand.vmem [shape: bf16[32,128], index: 11, kind: input, shape index: {}]
  %s12 = inlined_call_operand.vmem [shape: f32[1,128], index: 12, kind: input, shape index: {}]
  %s13 = inlined_call_operand.vmem [shape: f32[2,8,128], index: 13, kind: output, shape index: {}]
  %s14 = sld [smem:[#allocation0]]
  $region81: #{kobert_classifier_forward.1} parent=0
    _
  %s16 = ssub.s32 1, %s14
  %s17 = scalar_select 0, %s16, %s14
  %s18 = sshll.u32 %s0, 4
  %s19 = int_to_ptr.vmem [resolvable:$true] %s18
  %21 = dma.vmem_to_smem %s19, 16, [#allocation3], [#allocation2]
  %22 = dma.done [#allocation2], 16
  %23 = sfence
  loop: start=0, step=1, limit=4
  $region2: #{kobert_classifier_forward.1} parent=0 // loop_pre_header
    _
  $region3: #{kobert_classifier_forward.1} parent=0 // loop_header
    %s25 = sphi 0, %s29
    %p26 = scmp.ge.s32.totalorder %s25, 4
    %s35 = sphi 0, %s37
    %s38 = sphi 0, %s35
    %s39 = sphi 0, %s38
    %s55 = sphi 0, %s39
    %s59 = sphi 0, %s59
    %s61 = sphi 0, %s59
    %s62 = sphi 0, %s61
    %s76 = sphi 0, %s62
    %s80 = sphi 0, %s80
    %s82 = sphi 0, %s80
    %s83 = sphi 0, %s82
    %s97 = sphi 0, %s83
    %s101 = sphi 0, %s101
    %s103 = sphi 0, %s101
    %s104 = sphi 0, %s103
    %s118 = sphi 0, %s104
    %s122 = sphi 0, %s122
    %s124 = sphi 0, %s122
    %s125 = sphi 0, %s124
    %s139 = sphi 0, %s125
    %s143 = sphi 0, %s143
    %s145 = sphi 0, %s143
    %s146 = sphi 0, %s145
    %s160 = sphi 0, %s146
    %s164 = sphi 0, %s164
    %s166 = sphi 0, %s164
    %s167 = sphi 0, %s166
    %s181 = sphi 0, %s167
    %s185 = sphi 0, %s185
    %s187 = sphi 0, %s185
    %s188 = sphi 0, %s187
    %s202 = sphi 0, %s188
    %s206 = sphi 0, %s206
    %s208 = sphi 0, %s206
    %s209 = sphi 0, %s208
    %s223 = sphi 0, %s209
    %s227 = sphi 0, %s227
    %s229 = sphi 0, %s227
    %s230 = sphi 0, %s229
    %s244 = sphi 0, %s230
    %s248 = sphi 0, %s248
    %s250 = sphi 0, %s248
    %s251 = sphi 0, %s250
    %s265 = sphi 0, %s251
    %s269 = sphi 0, %s269
    %s271 = sphi 0, %s269
    %s272 = sphi 0, %s271
    %s286 = sphi 0, %s272
    %s292 = sphi 0, %s294
    %s295 = sphi 0, %s292
    %s296 = sphi 0, %s295
    %s312 = sphi 0, %s296
  $region4: #{kobert_classifier_forward.1} parent=0 // loop_header_branch
    %28 = sbr.rel (%p26) target = $region8
  $region5: #{kobert_classifier_forward.1} parent=0 // loop_body
    %s30 = ssub.s32 %s25, 1
    %s31 = ssub.s32 %s25, 2
    %s32 = sadd.s32 %s25, 1
    %s33 = ssub.s32 %s25, %s32
    %p34 = scmp.eq.s32.totalorder %s33, 0
    %s36 = sadd.s32 %s35, 1
    %s37 = scalar_select %p34, %s35, %s36
    %p40 = pneg %p34
    %p41 = scmp.eq.s32.totalorder %s25, 1
    %p42 = por %p40, %p41
    %p43 = scmp.ne.s32.totalorder %s35, %s38
    %p44 = scmp.eq.s32.totalorder %s25, 0
    %p45 = por %p43, %p44
    %p46 = scmp.ne.s32.totalorder %s35, %s38
    %p47 = scmp.eq.s32.totalorder %s30, 1
    %p48 = por %p46, %p47
    %p49 = scmp.ne.s32.totalorder %s38, %s39
    %p50 = scmp.eq.s32.totalorder %s30, 0
    %p51 = por %p49, %p50
    %p52 = scmp.ne.s32.totalorder %s38, %s39
    %p53 = scmp.eq.s32.totalorder %s31, 1
    %p54 = por %p52, %p53
    %p56 = scmp.ne.s32.totalorder %s39, %s55
    %p57 = scmp.eq.s32.totalorder %s31, 0
    %p58 = por %p56, %p57
    %s60 = sadd.s32 %s59, 1
    %p63 = scmp.eq.s32.totalorder %s25, 1
    %p64 = scmp.ne.s32.totalorder %s59, %s61
    %p65 = scmp.eq.s32.totalorder %s25, 0
    %p66 = por %p64, %p65
    %p67 = scmp.ne.s32.totalorder %s59, %s61
    %p68 = scmp.eq.s32.totalorder %s30, 1
    %p69 = por %p67, %p68
    %p70 = scmp.ne.s32.totalorder %s61, %s62
    %p71 = scmp.eq.s32.totalorder %s30, 0
    %p72 = por %p70, %p71
    %p73 = scmp.ne.s32.totalorder %s61, %s62
    %p74 = scmp.eq.s32.totalorder %s31, 1
    %p75 = por %p73, %p74
    %p77 = scmp.ne.s32.totalorder %s62, %s76
    %p78 = scmp.eq.s32.totalorder %s31, 0
    %p79 = por %p77, %p78
    %s81 = sadd.s32 %s80, 1
    %p84 = scmp.eq.s32.totalorder %s25, 1
    %p85 = scmp.ne.s32.totalorder %s80, %s82
    %p86 = scmp.eq.s32.totalorder %s25, 0
    %p87 = por %p85, %p86
    %p88 = scmp.ne.s32.totalorder %s80, %s82
    %p89 = scmp.eq.s32.totalorder %s30, 1
    %p90 = por %p88, %p89
    %p91 = scmp.ne.s32.totalorder %s82, %s83
    %p92 = scmp.eq.s32.totalorder %s30, 0
    %p93 = por %p91, %p92
    %p94 = scmp.ne.s32.totalorder %s82, %s83
    %p95 = scmp.eq.s32.totalorder %s31, 1
    %p96 = por %p94, %p95
    %p98 = scmp.ne.s32.totalorder %s83, %s97
    %p99 = scmp.eq.s32.totalorder %s31, 0
    %p100 = por %p98, %p99
    %s102 = sadd.s32 %s101, 1
    %p105 = scmp.eq.s32.totalorder %s25, 1
    %p106 = scmp.ne.s32.totalorder %s101, %s103
    %p107 = scmp.eq.s32.totalorder %s25, 0
    %p108 = por %p106, %p107
    %p109 = scmp.ne.s32.totalorder %s101, %s103
    %p110 = scmp.eq.s32.totalorder %s30, 1
    %p111 = por %p109, %p110
    %p112 = scmp.ne.s32.totalorder %s103, %s104
    %p113 = scmp.eq.s32.totalorder %s30, 0
    %p114 = por %p112, %p113
    %p115 = scmp.ne.s32.totalorder %s103, %s104
    %p116 = scmp.eq.s32.totalorder %s31, 1
    %p117 = por %p115, %p116
    %p119 = scmp.ne.s32.totalorder %s104, %s118
    %p120 = scmp.eq.s32.totalorder %s31, 0
    %p121 = por %p119, %p120
    %s123 = sadd.s32 %s122, 1
    %p126 = scmp.eq.s32.totalorder %s25, 1
    %p127 = scmp.ne.s32.totalorder %s122, %s124
    %p128 = scmp.eq.s32.totalorder %s25, 0
    %p129 = por %p127, %p128
    %p130 = scmp.ne.s32.totalorder %s122, %s124
    %p131 = scmp.eq.s32.totalorder %s30, 1
    %p132 = por %p130, %p131
    %p133 = scmp.ne.s32.totalorder %s124, %s125
    %p134 = scmp.eq.s32.totalorder %s30, 0
    %p135 = por %p133, %p134
    %p136 = scmp.ne.s32.totalorder %s124, %s125
    %p137 = scmp.eq.s32.totalorder %s31, 1
    %p138 = por %p136, %p137
    %p140 = scmp.ne.s32.totalorder %s125, %s139
    %p141 = scmp.eq.s32.totalorder %s31, 0
    %p142 = por %p140, %p141
    %s144 = sadd.s32 %s143, 1
    %p147 = scmp.eq.s32.totalorder %s25, 1
    %p148 = scmp.ne.s32.totalorder %s143, %s145
    %p149 = scmp.eq.s32.totalorder %s25, 0
    %p150 = por %p148, %p149
    %p151 = scmp.ne.s32.totalorder %s143, %s145
    %p152 = scmp.eq.s32.totalorder %s30, 1
    %p153 = por %p151, %p152
    %p154 = scmp.ne.s32.totalorder %s145, %s146
    %p155 = scmp.eq.s32.totalorder %s30, 0
    %p156 = por %p154, %p155
    %p157 = scmp.ne.s32.totalorder %s145, %s146
    %p158 = scmp.eq.s32.totalorder %s31, 1
    %p159 = por %p157, %p158
    %p161 = scmp.ne.s32.totalorder %s146, %s160
    %p162 = scmp.eq.s32.totalorder %s31, 0
    %p163 = por %p161, %p162
    %s165 = sadd.s32 %s164, 1
    %p168 = scmp.eq.s32.totalorder %s25, 1
    %p169 = scmp.ne.s32.totalorder %s164, %s166
    %p170 = scmp.eq.s32.totalorder %s25, 0
    %p171 = por %p169, %p170
    %p172 = scmp.ne.s32.totalorder %s164, %s166
    %p173 = scmp.eq.s32.totalorder %s30, 1
    %p174 = por %p172, %p173
    %p175 = scmp.ne.s32.totalorder %s166, %s167
    %p176 = scmp.eq.s32.totalorder %s30, 0
    %p177 = por %p175, %p176
    %p178 = scmp.ne.s32.totalorder %s166, %s167
    %p179 = scmp.eq.s32.totalorder %s31, 1
    %p180 = por %p178, %p179
    %p182 = scmp.ne.s32.totalorder %s167, %s181
    %p183 = scmp.eq.s32.totalorder %s31, 0
    %p184 = por %p182, %p183
    %s186 = sadd.s32 %s185, 1
    %p189 = scmp.eq.s32.totalorder %s25, 1
    %p190 = scmp.ne.s32.totalorder %s185, %s187
    %p191 = scmp.eq.s32.totalorder %s25, 0
    %p192 = por %p190, %p191
    %p193 = scmp.ne.s32.totalorder %s185, %s187
    %p194 = scmp.eq.s32.totalorder %s30, 1
    %p195 = por %p193, %p194
    %p196 = scmp.ne.s32.totalorder %s187, %s188
    %p197 = scmp.eq.s32.totalorder %s30, 0
    %p198 = por %p196, %p197
    %p199 = scmp.ne.s32.totalorder %s187, %s188
    %p200 = scmp.eq.s32.totalorder %s31, 1
    %p201 = por %p199, %p200
    %p203 = scmp.ne.s32.totalorder %s188, %s202
    %p204 = scmp.eq.s32.totalorder %s31, 0
    %p205 = por %p203, %p204
    %s207 = sadd.s32 %s206, 1
    %p210 = scmp.eq.s32.totalorder %s25, 1
    %p211 = scmp.ne.s32.totalorder %s206, %s208
    %p212 = scmp.eq.s32.totalorder %s25, 0
    %p213 = por %p211, %p212
    %p214 = scmp.ne.s32.totalorder %s206, %s208
    %p215 = scmp.eq.s32.totalorder %s30, 1
    %p216 = por %p214, %p215
    %p217 = scmp.ne.s32.totalorder %s208, %s209
    %p218 = scmp.eq.s32.totalorder %s30, 0
    %p219 = por %p217, %p218
    %p220 = scmp.ne.s32.totalorder %s208, %s209
    %p221 = scmp.eq.s32.totalorder %s31, 1
    %p222 = por %p220, %p221
    %p224 = scmp.ne.s32.totalorder %s209, %s223
    %p225 = scmp.eq.s32.totalorder %s31, 0
    %p226 = por %p224, %p225
    %s228 = sadd.s32 %s227, 1
    %p231 = scmp.eq.s32.totalorder %s25, 1
    %p232 = scmp.ne.s32.totalorder %s227, %s229
    %p233 = scmp.eq.s32.totalorder %s25, 0
    %p234 = por %p232, %p233
    %p235 = scmp.ne.s32.totalorder %s227, %s229
    %p236 = scmp.eq.s32.totalorder %s30, 1
    %p237 = por %p235, %p236
    %p238 = scmp.ne.s32.totalorder %s229, %s230
    %p239 = scmp.eq.s32.totalorder %s30, 0
    %p240 = por %p238, %p239
    %p241 = scmp.ne.s32.totalorder %s229, %s230
    %p242 = scmp.eq.s32.totalorder %s31, 1
    %p243 = por %p241, %p242
    %p245 = scmp.ne.s32.totalorder %s230, %s244
    %p246 = scmp.eq.s32.totalorder %s31, 0
    %p247 = por %p245, %p246
    %s249 = sadd.s32 %s248, 1
    %p252 = scmp.eq.s32.totalorder %s25, 1
    %p253 = scmp.ne.s32.totalorder %s248, %s250
    %p254 = scmp.eq.s32.totalorder %s25, 0
    %p255 = por %p253, %p254
    %p256 = scmp.ne.s32.totalorder %s248, %s250
    %p257 = scmp.eq.s32.totalorder %s30, 1
    %p258 = por %p256, %p257
    %p259 = scmp.ne.s32.totalorder %s250, %s251
    %p260 = scmp.eq.s32.totalorder %s30, 0
    %p261 = por %p259, %p260
    %p262 = scmp.ne.s32.totalorder %s250, %s251
    %p263 = scmp.eq.s32.totalorder %s31, 1
    %p264 = por %p262, %p263
    %p266 = scmp.ne.s32.totalorder %s251, %s265
    %p267 = scmp.eq.s32.totalorder %s31, 0
    %p268 = por %p266, %p267
    %s270 = sadd.s32 %s269, 1
    %p273 = scmp.eq.s32.totalorder %s25, 1
    %p274 = scmp.ne.s32.totalorder %s269, %s271
    %p275 = scmp.eq.s32.totalorder %s25, 0
    %p276 = por %p274, %p275
    %p277 = scmp.ne.s32.totalorder %s269, %s271
    %p278 = scmp.eq.s32.totalorder %s30, 1
    %p279 = por %p277, %p278
    %p280 = scmp.ne.s32.totalorder %s271, %s272
    %p281 = scmp.eq.s32.totalorder %s30, 0
    %p282 = por %p280, %p281
    %p283 = scmp.ne.s32.totalorder %s271, %s272
    %p284 = scmp.eq.s32.totalorder %s31, 1
    %p285 = por %p283, %p284
    %p287 = scmp.ne.s32.totalorder %s272, %s286
    %p288 = scmp.eq.s32.totalorder %s31, 0
    %p289 = por %p287, %p288
    %s290 = ssub.s32 %s25, %s32
    %p291 = scmp.eq.s32.totalorder %s290, 0
    %s293 = sadd.s32 %s292, 1
    %s294 = scalar_select %p291, %s292, %s293
    %p297 = pneg %p291
    %p298 = scmp.eq.s32.totalorder %s25, 1
    %p299 = por %p297, %p298
    %p300 = scmp.ne.s32.totalorder %s292, %s295
    %p301 = scmp.eq.s32.totalorder %s25, 0
    %p302 = por %p300, %p301
    %p303 = scmp.ne.s32.totalorder %s292, %s295
    %p304 = scmp.eq.s32.totalorder %s30, 1
    %p305 = por %p303, %p304
    %p306 = scmp.ne.s32.totalorder %s295, %s296
    %p307 = scmp.eq.s32.totalorder %s30, 0
    %p308 = por %p306, %p307
    %p309 = scmp.ne.s32.totalorder %s295, %s296
    %p310 = scmp.eq.s32.totalorder %s31, 1
    %p311 = por %p309, %p310
    %p313 = scmp.ne.s32.totalorder %s296, %s312
    %p314 = scmp.eq.s32.totalorder %s31, 0
    %p315 = por %p313, %p314
    %p316 = scmp.le.s32.totalorder 1, %s25
    %p317 = scmp.lt.s32.totalorder %s25, 3
    %p318 = pnand %p316, %p317
    %p319 = pneg %p318
    // Predicated region
    $region9: #{kobert_classifier_forward.1} parent=5 // pred_check
      _
    $region10: #{kobert_classifier_forward.1} parent=5 // pred_check_branch
      %321 = sbr.rel (%p318) target = $region12
    $region11: #{kobert_classifier_forward.1} parent=5 // pred_region
      %s322 = ssub.s32 %s25, 1
      // Predicated region
      $region13: #{kobert_classifier_forward.1} parent=11 // pred_check
        %p323 = pneg %p72
      $region14: #{kobert_classifier_forward.1} parent=11 // pred_check_branch
        %325 = sbr.rel (%p323) target = $region16
      $region15: #{kobert_classifier_forward.1} parent=11 // pred_region
        _
      $region16: #{kobert_classifier_forward.1} parent=11 // pred_fallthru
        _
      // Predicated region
      $region17: #{kobert_classifier_forward.1} parent=11 // pred_check
        %p326 = pneg %p93
      $region18: #{kobert_classifier_forward.1} parent=11 // pred_check_branch
        %328 = sbr.rel (%p326) target = $region20
      $region19: #{kobert_classifier_forward.1} parent=11 // pred_region
        _
      $region20: #{kobert_classifier_forward.1} parent=11 // pred_fallthru
        _
      // Predicated region
      $region21: #{kobert_classifier_forward.1} parent=11 // pred_check
        %p329 = pneg %p114
      $region22: #{kobert_classifier_forward.1} parent=11 // pred_check_branch
        %331 = sbr.rel (%p329) target = $region24
      $region23: #{kobert_classifier_forward.1} parent=11 // pred_region
        _
      $region24: #{kobert_classifier_forward.1} parent=11 // pred_fallthru
        _
      // Predicated region
      $region25: #{kobert_classifier_forward.1} parent=11 // pred_check
        %p332 = pneg %p135
      $region26: #{kobert_classifier_forward.1} parent=11 // pred_check_branch
        %334 = sbr.rel (%p332) target = $region28
      $region27: #{kobert_classifier_forward.1} parent=11 // pred_region
        _
      $region28: #{kobert_classifier_forward.1} parent=11 // pred_fallthru
        _
      // Predicated region
      $region29: #{kobert_classifier_forward.1} parent=11 // pred_check
        %p335 = pneg %p156
      $region30: #{kobert_classifier_forward.1} parent=11 // pred_check_branch
        %337 = sbr.rel (%p335) target = $region32
      $region31: #{kobert_classifier_forward.1} parent=11 // pred_region
        _
      $region32: #{kobert_classifier_forward.1} parent=11 // pred_fallthru
        _
      // Predicated region
      $region33: #{kobert_classifier_forward.1} parent=11 // pred_check
        %p338 = pneg %p177
      $region34: #{kobert_classifier_forward.1} parent=11 // pred_check_branch
        %340 = sbr.rel (%p338) target = $region36
      $region35: #{kobert_classifier_forward.1} parent=11 // pred_region
        _
      $region36: #{kobert_classifier_forward.1} parent=11 // pred_fallthru
        _
      // Predicated region
      $region37: #{kobert_classifier_forward.1} parent=11 // pred_check
        %p341 = pneg %p198
      $region38: #{kobert_classifier_forward.1} parent=11 // pred_check_branch
        %343 = sbr.rel (%p341) target = $region40
      $region39: #{kobert_classifier_forward.1} parent=11 // pred_region
        _
      $region40: #{kobert_classifier_forward.1} parent=11 // pred_fallthru
        _
      // Predicated region
      $region41: #{kobert_classifier_forward.1} parent=11 // pred_check
        %p344 = pneg %p219
      $region42: #{kobert_classifier_forward.1} parent=11 // pred_check_branch
        %346 = sbr.rel (%p344) target = $region44
      $region43: #{kobert_classifier_forward.1} parent=11 // pred_region
        _
      $region44: #{kobert_classifier_forward.1} parent=11 // pred_fallthru
        _
      // Predicated region
      $region45: #{kobert_classifier_forward.1} parent=11 // pred_check
        %p347 = pneg %p240
      $region46: #{kobert_classifier_forward.1} parent=11 // pred_check_branch
        %349 = sbr.rel (%p347) target = $region48
      $region47: #{kobert_classifier_forward.1} parent=11 // pred_region
        _
      $region48: #{kobert_classifier_forward.1} parent=11 // pred_fallthru
        _
      // Predicated region
      $region49: #{kobert_classifier_forward.1} parent=11 // pred_check
        %p350 = pneg %p261
      $region50: #{kobert_classifier_forward.1} parent=11 // pred_check_branch
        %352 = sbr.rel (%p350) target = $region52
      $region51: #{kobert_classifier_forward.1} parent=11 // pred_region
        _
      $region52: #{kobert_classifier_forward.1} parent=11 // pred_fallthru
        _
      // Predicated region
      $region53: #{kobert_classifier_forward.1} parent=11 // pred_check
        %p353 = pneg %p282
      $region54: #{kobert_classifier_forward.1} parent=11 // pred_check_branch
        %355 = sbr.rel (%p353) target = $region56
      $region55: #{kobert_classifier_forward.1} parent=11 // pred_region
        _
      $region56: #{kobert_classifier_forward.1} parent=11 // pred_fallthru
        _
    $region12: #{kobert_classifier_forward.1} parent=5 // pred_fallthru
      _
    %p356 = scmp.lt.s32.totalorder %s25, 2
    // Predicated region
    $region57: #{kobert_classifier_forward.1} parent=5 // pred_check
      %p357 = pneg %p356
    $region58: #{kobert_classifier_forward.1} parent=5 // pred_check_branch
      %359 = sbr.rel (%p357) target = $region60
    $region59: #{kobert_classifier_forward.1} parent=5 // pred_region
      // Predicated region
      $region61: #{kobert_classifier_forward.1} parent=59 // pred_check
        %p360 = pneg %p45
      $region62: #{kobert_classifier_forward.1} parent=59 // pred_check_branch
        %362 = sbr.rel (%p360) target = $region64
      $region63: #{kobert_classifier_forward.1} parent=59 // pred_region
        %p363 = scmp.lt.s32.totalorder %s25, 1
        %s364 = scalar_select %p363, %s25, 1
        %s365 = smul.addr %s364, 8
        %s366 = scalar_lea.vmem %s1, %s365
      $region64: #{kobert_classifier_forward.1} parent=59 // pred_fallthru
        _
    $region60: #{kobert_classifier_forward.1} parent=5 // pred_fallthru
      _
    %p367 = scmp.le.s32.totalorder 1, %s25
    %p368 = scmp.lt.s32.totalorder %s25, 3
    %p369 = pnand %p367, %p368
    %p370 = pneg %p369
    // Predicated region
    $region65: #{kobert_classifier_forward.1} parent=5 // pred_check
      _
    $region66: #{kobert_classifier_forward.1} parent=5 // pred_check_branch
      %372 = sbr.rel (%p369) target = $region68
    $region67: #{kobert_classifier_forward.1} parent=5 // pred_region
      %s373 = ssub.s32 %s25, 1
      %p374 = scmp.lt.s32.totalorder %s30, 1
      %s375 = scalar_select %p374, %s30, 1
      %s376 = smul.addr %s375, 8
      %s377 = scalar_lea.vmem %s1, %s376
      %p378 = pneg %p51
      %p379 = pneg %p48
      %p380 = pneg %p72
      %p381 = pneg %p69
      %p382 = pneg %p93
      %p383 = pneg %p90
      %p384 = pneg %p114
      %p385 = pneg %p111
      %p386 = pneg %p135
      %p387 = pneg %p132
      %p388 = pneg %p156
      %p389 = pneg %p153
      %p390 = pneg %p177
      %p391 = pneg %p174
      %p392 = pneg %p198
      %p393 = pneg %p195
      %p394 = pneg %p219
      %p395 = pneg %p216
      %p396 = pneg %p240
      %p397 = pneg %p237
      %p398 = pneg %p261
      %p399 = pneg %p258
      %p400 = pneg %p282
      %p401 = pneg %p279
      %p402 = pneg %p308
      %p403 = pneg %p305
      %p404 = scmp.lt.s32.totalorder %s30, 1
      %s405 = scalar_select %p404, %s30, 1
      %s406 = smul.addr %s405, 8
      %s407 = scalar_lea.vmem %s13, %s406
      %p408 = scmp.lt.s32.totalorder %s30, 1
      %s409 = scalar_select %p408, %s30, 1
      %s410 = smul.addr %s409, 8
      %s411 = scalar_lea.vmem %s1, %s410
      %p412 = scmp.lt.s32.totalorder %s30, 1
      %s413 = scalar_select %p412, %s30, 1
      %s414 = smul.addr %s413, 8
      %s415 = scalar_lea.vmem %s13, %s414
      %v417 = vlaneseq
      %v418 = vand.u32 %v417, 127
      %s419 = sld [smem:[#allocation3 + %s30]]
      %v420 = vstv %s419
      %vm421 = vcmp.lt.s32.totalorder %v418, %v420
      %v422 = vsel %vm421, 0.0, -1e+09
      %v423 = vld [vmem:[%s2] sm:$0x7]
      %v424 = vld [vmem:[%s411] sm:$0xff]
      %vm425 = vcmask 261120
      %v426 = vsel %vm425, %v424, 0.0
      %427 = vadd.xlane.f32.xlu0 %v426
      %v428 = vpop.xlane.xlu0 %427
      %v429 = vrcp.pop 32.0
      %v430 = vmul.f32 %v428, %v429
      %v431 = vsub.f32 %v424, %v430
      %v432 = vmul.f32 %v431, %v431
      %v433 = vsel %vm425, %v432, 0.0
      %434 = vadd.xlane.f32.xlu0 %v433
      %v435 = vpop.xlane.xlu0 %434
      %v436 = vmul.f32 %v435, %v429
      %v437 = vadd.f32 %v436, 1e-12
      %v438 = vrsqrt.pop %v437
      %v439 = vmul.f32 %v431, %v438
      %v440 = vlaneseq
      %v441 = vshrl.u32 %v440, 7
      %v442 = vsub.s32 0, %v441
      %v443 = vrot.slane %v423, %v442
      %v444 = vmul.f32 %v439, %v443
      %v445 = vlaneseq
      %v446 = vshrl.u32 %v445, 7
      %v447 = vsub.s32 1, %v446
      %v448 = vrot.slane %v423, %v447
      %v449 = vadd.f32 %v444, %v448
      %v450 = vld [vmem:[%s9] sm:$0x3f]
      %v451 = vpack.c.bf16 %v449, %v449
      %v452 = vld [vmem:[%s3] sm:$0xf]
      %v453 = vld [vmem:[%s3 + $0x4] sm:$0xf]
      %v454 = vld [vmem:[%s3 + $0x8] sm:$0xf]
      %v455 = vld [vmem:[%s3 + $0xc] sm:$0xf]
      %v456 = vld [vmem:[%s4] sm:$0x1]
      %v458 = vlaneseq
      %v459 = vshrl.u32 %v458, 7
      %v460 = vsub.s32 0, %v459
      %v461 = vrot.slane %v456, %v460
      %v467 = vunpack.c.l.b16 %v452
      %v468 = vunpack.c.l.b16 %v453
      %v469 = vunpack.c.l.b16 %v454
      %v470 = vunpack.c.l.b16 %v455
      %v471 = vpack.c.b16 %v468, %v467
      %v472 = vpack.c.b16 %v470, %v469
      %v476 = vsel %vm425, %v451, 0
      %478 = vmatprep.subr.bf16.mxu0 0
      %479 = vmatpush1.bf16.msra.mxu0 %v471
      %480 = vmatprep.subr.bf16.mxu0 0
      %481 = vmatpush1.bf16.msra.mxu0 %v472
      %482 = vmatprep.subr.bf16.mxu0 0
      %483 = vmatpush1.bf16.msra.mxu0 0
      %484 = vmatprep.subr.bf16.mxu0 0
      %485 = vmatpush1.bf16.msra.mxu0 0
      %486 = vmatprep.subr.bf16.mxu0 0
      %487 = vmatpush1.bf16.msra.mxu0 0
      %488 = vmatprep.subr.bf16.mxu0 0
      %489 = vmatpush1.bf16.msra.mxu0 0
      %490 = vmatprep.subr.bf16.mxu0 0
      %491 = vmatpush1.bf16.msra.mxu0 0
      %492 = vmatprep.subr.bf16.mxu0 0
      %493 = vmatpush1.bf16.msra.mxu0 0
      %494 = vmatprep.subr.bf16.mxu0 0
      %495 = vmatpush1.bf16.msra.mxu0 0
      %496 = vmatprep.subr.bf16.mxu0 0
      %497 = vmatpush1.bf16.msra.mxu0 0
      %498 = vmatprep.subr.bf16.mxu0 0
      %499 = vmatpush1.bf16.msra.mxu0 0
      %500 = vmatprep.subr.bf16.mxu0 0
      %501 = vmatpush1.bf16.msra.mxu0 0
      %502 = vmatprep.subr.bf16.mxu0 0
      %503 = vmatpush1.bf16.msra.mxu0 0
      %504 = vmatprep.subr.bf16.mxu0 0
      %505 = vmatpush1.bf16.msra.mxu0 0
      %506 = vmatprep.subr.bf16.mxu0 0
      %507 = vmatpush1.bf16.msra.mxu0 0
      %508 = vmatprep.subr.bf16.mxu0 0
      %509 = vmatpush1.bf16.msra.mxu0 0
      %510 = vmatprep.mubr.bf16.mxu0 0
      %511 = vmatmul.mubr.bf16.gmra.mrb[0].mxu0 %v476
      %v512 = vpop.f32.mrb[0].mxu0
      %v513 = vadd.f32 %v461, %v512
      %v514 = vpop.f32.mrb[0].mxu0
      %v515 = vpop.f32.mrb[0].mxu0
      %v516 = vpop.f32.mrb[0].mxu0
      %517 = vdwg.mxu0
      %519 = vrot.lane.b32.xlu0 %v513, 96
      %v520 = vpop.permute.xlu0 %519
      %vm521 = vcmask 130048
      %v522 = vsel %vm521, %v513, 0
      %v524 = vsel %vm521, %v520, 0
      %526 = vmatprep.subr.mxu0 0.0
      %527 = vmatpush1.xpose.msra.mxu0 %v524
      %528 = vmatprep.subr.mxu0 0.0
      %529 = vmatpush1.xpose.msra.mxu0 0.0
      %530 = vmatprep.subr.mxu0 0.0
      %531 = vmatpush1.xpose.msra.mxu0 0.0
      %532 = vmatprep.subr.mxu0 0.0
      %533 = vmatpush1.xpose.msra.mxu0 0.0
      %534 = vmatprep.subr.mxu0 0.0
      %535 = vmatpush1.xpose.msra.mxu0 0.0
      %536 = vmatprep.subr.mxu0 0.0
      %537 = vmatpush1.xpose.msra.mxu0 0.0
      %538 = vmatprep.subr.mxu0 0.0
      %539 = vmatpush1.xpose.msra.mxu0 0.0
      %540 = vmatprep.subr.mxu0 0.0
      %541 = vmatpush1.xpose.msra.mxu0 0.0
      %542 = vmatprep.subr.mxu0 0.0
      %543 = vmatpush1.xpose.msra.mxu0 0.0
      %544 = vmatprep.subr.mxu0 0.0
      %545 = vmatpush1.xpose.msra.mxu0 0.0
      %546 = vmatprep.subr.mxu0 0.0
      %547 = vmatpush1.xpose.msra.mxu0 0.0
      %548 = vmatprep.subr.mxu0 0.0
      %549 = vmatpush1.xpose.msra.mxu0 0.0
      %550 = vmatprep.subr.mxu0 0.0
      %551 = vmatpush1.xpose.msra.mxu0 0.0
      %552 = vmatprep.subr.mxu0 0.0
      %553 = vmatpush1.xpose.msra.mxu0 0.0
      %554 = vmatprep.subr.mxu0 0.0
      %555 = vmatpush1.xpose.msra.mxu0 0.0
      %556 = vmatprep.subr.mxu0 0.0
      %557 = vmatpush1.xpose.msra.mxu0 0.0
      %558 = vmatprep.subr.mxu0 0.0
      %559 = vmatpush1.xpose.msra.mxu0 0.0
      %560 = vmatprep.subr.mxu0 0.0
      %561 = vmatpush1.xpose.msra.mxu0 0.0
      %562 = vmatprep.subr.mxu0 0.0
      %563 = vmatpush1.xpose.msra.mxu0 0.0
      %564 = vmatprep.subr.mxu0 0.0
      %565 = vmatpush1.xpose.msra.mxu0 0.0
      %566 = vmatprep.subr.mxu0 0.0
      %567 = vmatpush1.xpose.msra.mxu0 0.0
      %568 = vmatprep.subr.mxu0 0.0
      %569 = vmatpush1.xpose.msra.mxu0 0.0
      %570 = vmatprep.subr.mxu0 0.0
      %571 = vmatpush1.xpose.msra.mxu0 0.0
      %572 = vmatprep.subr.mxu0 0.0
      %573 = vmatpush1.xpose.msra.mxu0 0.0
      %574 = vmatprep.subr.mxu0 0.0
      %575 = vmatpush1.xpose.msra.mxu0 0.0
      %576 = vmatprep.subr.mxu0 0.0
      %577 = vmatpush1.xpose.msra.mxu0 0.0
      %578 = vmatprep.subr.mxu0 0.0
      %579 = vmatpush1.xpose.msra.mxu0 0.0
      %580 = vmatprep.subr.mxu0 0.0
      %581 = vmatpush1.xpose.msra.mxu0 0.0
      %582 = vmatprep.subr.mxu0 0.0
      %583 = vmatpush1.xpose.msra.mxu0 0.0
      %584 = vmatprep.subr.mxu0 0.0
      %585 = vmatpush1.xpose.msra.mxu0 0.0
      %586 = vmatprep.subr.mxu0 0.0
      %587 = vmatpush1.xpose.msra.mxu0 0.0
      %588 = vmatprep.subr.mxu0 0.0
      %589 = vmatpush1.xpose.msra.mxu0 0.0
      %590 = vmatprep.mubr.f32.mxu0 0.0
      %591 = vmatmul.mubr.f32.gmra.mrb[0].mxu0 %v522
      %v592 = vpop.f32.mrb[0].mxu0
      %v593 = vadd.f32 0.0, %v592
      %v594 = vpop.f32.mrb[0].mxu0
      %595 = vdwg.mxu0
      %v596 = vmul.f32 %v593, 0.25
      %v597 = vadd.f32 %v596, %v422
      %vm598 = vcmask 64512
      %v599 = vsel %vm598, %v597, -inf
      %600 = vmax.xlane.f32.xlu0 %v599
      %v601 = vpop.xlane.xlu0 %600
      %v602 = vsub.f32 %v597, %v601
      %v603 = vmul.f32 %v602, 1.442695
      %v604 = vpow.pop %v603
      %v605 = vsel %vm598, %v604, 0.0
      %606 = vadd.xlane.f32.xlu0 %v605
      %v607 = vpop.xlane.xlu0 %606
      %v608 = vrcp.pop %v607
      %v609 = vmul.f32 %v604, %v608
      %610 = vrot.lane.b32.xlu0 %v513, 64
      %v611 = vpop.permute.xlu0 %610
      %v614 = vsel %vm598, %v609, 0
      %616 = vmatprep.subr.mxu0 0.0
      %617 = vmatpush1.msra.mxu0 %v611
      %618 = vmatprep.subr.mxu0 0.0
      %619 = vmatpush1.msra.mxu0 0.0
      %620 = vmatprep.subr.mxu0 0.0
      %621 = vmatpush1.msra.mxu0 0.0
      %622 = vmatprep.subr.mxu0 0.0
      %623 = vmatpush1.msra.mxu0 0.0
      %624 = vmatprep.subr.mxu0 0.0
      %625 = vmatpush1.msra.mxu0 0.0
      %626 = vmatprep.subr.mxu0 0.0
      %627 = vmatpush1.msra.mxu0 0.0
      %628 = vmatprep.subr.mxu0 0.0
      %629 = vmatpush1.msra.mxu0 0.0
      %630 = vmatprep.subr.mxu0 0.0
      %631 = vmatpush1.msra.mxu0 0.0
      %632 = vmatprep.subr.mxu0 0.0
      %633 = vmatpush1.msra.mxu0 0.0
      %634 = vmatprep.subr.mxu0 0.0
      %635 = vmatpush1.msra.mxu0 0.0
      %636 = vmatprep.subr.mxu0 0.0
      %637 = vmatpush1.msra.mxu0 0.0
      %638 = vmatprep.subr.mxu0 0.0
      %639 = vmatpush1.msra.mxu0 0.0
      %640 = vmatprep.subr.mxu0 0.0
      %641 = vmatpush1.msra.mxu0 0.0
      %642 = vmatprep.subr.mxu0 0.0
      %643 = vmatpush1.msra.mxu0 0.0
      %644 = vmatprep.subr.mxu0 0.0
      %645 = vmatpush1.msra.mxu0 0.0
      %646 = vmatprep.subr.mxu0 0.0
      %647 = vmatpush1.msra.mxu0 0.0
      %648 = vmatprep.subr.mxu0 0.0
      %649 = vmatpush1.msra.mxu0 0.0
      %650 = vmatprep.subr.mxu0 0.0
      %651 = vmatpush1.msra.mxu0 0.0
      %652 = vmatprep.subr.mxu0 0.0
      %653 = vmatpush1.msra.mxu0 0.0
      %654 = vmatprep.subr.mxu0 0.0
      %655 = vmatpush1.msra.mxu0 0.0
      %656 = vmatprep.subr.mxu0 0.0
      %657 = vmatpush1.msra.mxu0 0.0
      %658 = vmatprep.subr.mxu0 0.0
      %659 = vmatpush1.msra.mxu0 0.0
      %660 = vmatprep.subr.mxu0 0.0
      %661 = vmatpush1.msra.mxu0 0.0
      %662 = vmatprep.subr.mxu0 0.0
      %663 = vmatpush1.msra.mxu0 0.0
      %664 = vmatprep.subr.mxu0 0.0
      %665 = vmatpush1.msra.mxu0 0.0
      %666 = vmatprep.subr.mxu0 0.0
      %667 = vmatpush1.msra.mxu0 0.0
      %668 = vmatprep.subr.mxu0 0.0
      %669 = vmatpush1.msra.mxu0 0.0
      %670 = vmatprep.subr.mxu0 0.0
      %671 = vmatpush1.msra.mxu0 0.0
      %672 = vmatprep.subr.mxu0 0.0
      %673 = vmatpush1.msra.mxu0 0.0
      %674 = vmatprep.subr.mxu0 0.0
      %675 = vmatpush1.msra.mxu0 0.0
      %676 = vmatprep.subr.mxu0 0.0
      %677 = vmatpush1.msra.mxu0 0.0
      %678 = vmatprep.subr.mxu0 0.0
      %679 = vmatpush1.msra.mxu0 0.0
      %680 = vmatprep.mubr.f32.mxu0 0.0
      %681 = vmatmul.mubr.f32.gmra.mrb[0].mxu0 %v614
      %v682 = vpop.f32.mrb[0].mxu0
      %v683 = vadd.f32 0.0, %v682
      %v684 = vpop.f32.mrb[0].mxu0
      %685 = vdwg.mxu0
      %686 = vrot.lane.b32.xlu0 %v513, 112
      %v687 = vpop.permute.xlu0 %686
      %688 = vrot.lane.b32.xlu0 %v513, 80
      %v689 = vpop.permute.xlu0 %688
      %v690 = vsel %vm521, %v687, 0
      %v692 = vsel %vm521, %v689, 0
      %694 = vmatprep.subr.mxu0 0.0
      %695 = vmatpush1.xpose.msra.mxu0 %v692
      %696 = vmatprep.subr.mxu0 0.0
      %697 = vmatpush1.xpose.msra.mxu0 0.0
      %698 = vmatprep.subr.mxu0 0.0
      %699 = vmatpush1.xpose.msra.mxu0 0.0
      %700 = vmatprep.subr.mxu0 0.0
      %701 = vmatpush1.xpose.msra.mxu0 0.0
      %702 = vmatprep.subr.mxu0 0.0
      %703 = vmatpush1.xpose.msra.mxu0 0.0
      %704 = vmatprep.subr.mxu0 0.0
      %705 = vmatpush1.xpose.msra.mxu0 0.0
      %706 = vmatprep.subr.mxu0 0.0
      %707 = vmatpush1.xpose.msra.mxu0 0.0
      %708 = vmatprep.subr.mxu0 0.0
      %709 = vmatpush1.xpose.msra.mxu0 0.0
      %710 = vmatprep.subr.mxu0 0.0
      %711 = vmatpush1.xpose.msra.mxu0 0.0
      %712 = vmatprep.subr.mxu0 0.0
      %713 = vmatpush1.xpose.msra.mxu0 0.0
      %714 = vmatprep.subr.mxu0 0.0
      %715 = vmatpush1.xpose.msra.mxu0 0.0
      %716 = vmatprep.subr.mxu0 0.0
      %717 = vmatpush1.xpose.msra.mxu0 0.0
      %718 = vmatprep.subr.mxu0 0.0
      %719 = vmatpush1.xpose.msra.mxu0 0.0
      %720 = vmatprep.subr.mxu0 0.0
      %721 = vmatpush1.xpose.msra.mxu0 0.0
      %722 = vmatprep.subr.mxu0 0.0
      %723 = vmatpush1.xpose.msra.mxu0 0.0
      %724 = vmatprep.subr.mxu0 0.0
      %725 = vmatpush1.xpose.msra.mxu0 0.0
      %726 = vmatprep.subr.mxu0 0.0
      %727 = vmatpush1.xpose.msra.mxu0 0.0
      %728 = vmatprep.subr.mxu0 0.0
      %729 = vmatpush1.xpose.msra.mxu0 0.0
      %730 = vmatprep.subr.mxu0 0.0
      %731 = vmatpush1.xpose.msra.mxu0 0.0
      %732 = vmatprep.subr.mxu0 0.0
      %733 = vmatpush1.xpose.msra.mxu0 0.0
      %734 = vmatprep.subr.mxu0 0.0
      %735 = vmatpush1.xpose.msra.mxu0 0.0
      %736 = vmatprep.subr.mxu0 0.0
      %737 = vmatpush1.xpose.msra.mxu0 0.0
      %738 = vmatprep.subr.mxu0 0.0
      %739 = vmatpush1.xpose.msra.mxu0 0.0
      %740 = vmatprep.subr.mxu0 0.0
      %741 = vmatpush1.xpose.msra.mxu0 0.0
      %742 = vmatprep.subr.mxu0 0.0
      %743 = vmatpush1.xpose.msra.mxu0 0.0
      %744 = vmatprep.subr.mxu0 0.0
      %745 = vmatpush1.xpose.msra.mxu0 0.0
      %746 = vmatprep.subr.mxu0 0.0
      %747 = vmatpush1.xpose.msra.mxu0 0.0
      %748 = vmatprep.subr.mxu0 0.0
      %749 = vmatpush1.xpose.msra.mxu0 0.0
      %750 = vmatprep.subr.mxu0 0.0
      %751 = vmatpush1.xpose.msra.mxu0 0.0
      %752 = vmatprep.subr.mxu0 0.0
      %753 = vmatpush1.xpose.msra.mxu0 0.0
      %754 = vmatprep.subr.mxu0 0.0
      %755 = vmatpush1.xpose.msra.mxu0 0.0
      %756 = vmatprep.subr.mxu0 0.0
      %757 = vmatpush1.xpose.msra.mxu0 0.0
      %758 = vmatprep.mubr.f32.mxu0 0.0
      %759 = vmatmul.mubr.f32.gmra.mrb[0].mxu0 %v690
      %v760 = vpop.f32.mrb[0].mxu0
      %v761 = vadd.f32 0.0, %v760
      %v762 = vpop.f32.mrb[0].mxu0
      %763 = vdwg.mxu0
      %v764 = vmul.f32 %v761, 0.25
      %v765 = vadd.f32 %v764, %v422
      %v766 = vsel %vm598, %v765, -inf
      %767 = vmax.xlane.f32.xlu0 %v766
      %v768 = vpop.xlane.xlu0 %767
      %v769 = vsub.f32 %v765, %v768
      %v770 = vmul.f32 %v769, 1.442695
      %v771 = vpow.pop %v770
      %v772 = vsel %vm598, %v771, 0.0
      %773 = vadd.xlane.f32.xlu0 %v772
      %v774 = vpop.xlane.xlu0 %773
      %v775 = vrcp.pop %v774
      %v776 = vmul.f32 %v771, %v775
      %777 = vrot.lane.b32.xlu0 %v513, 48
      %v778 = vpop.permute.xlu0 %777
      %v781 = vsel %vm598, %v776, 0
      %783 = vmatprep.subr.mxu0 0.0
      %784 = vmatpush1.msra.mxu0 %v778
      %785 = vmatprep.subr.mxu0 0.0
      %786 = vmatpush1.msra.mxu0 0.0
      %787 = vmatprep.subr.mxu0 0.0
      %788 = vmatpush1.msra.mxu0 0.0
      %789 = vmatprep.subr.mxu0 0.0
      %790 = vmatpush1.msra.mxu0 0.0
      %791 = vmatprep.subr.mxu0 0.0
      %792 = vmatpush1.msra.mxu0 0.0
      %793 = vmatprep.subr.mxu0 0.0
      %794 = vmatpush1.msra.mxu0 0.0
      %795 = vmatprep.subr.mxu0 0.0
      %796 = vmatpush1.msra.mxu0 0.0
      %797 = vmatprep.subr.mxu0 0.0
      %798 = vmatpush1.msra.mxu0 0.0
      %799 = vmatprep.subr.mxu0 0.0
      %800 = vmatpush1.msra.mxu0 0.0
      %801 = vmatprep.subr.mxu0 0.0
      %802 = vmatpush1.msra.mxu0 0.0
      %803 = vmatprep.subr.mxu0 0.0
      %804 = vmatpush1.msra.mxu0 0.0
      %805 = vmatprep.subr.mxu0 0.0
      %806 = vmatpush1.msra.mxu0 0.0
      %807 = vmatprep.subr.mxu0 0.0
      %808 = vmatpush1.msra.mxu0 0.0
      %809 = vmatprep.subr.mxu0 0.0
      %810 = vmatpush1.msra.mxu0 0.0
      %811 = vmatprep.subr.mxu0 0.0
      %812 = vmatpush1.msra.mxu0 0.0
      %813 = vmatprep.subr.mxu0 0.0
      %814 = vmatpush1.msra.mxu0 0.0
      %815 = vmatprep.subr.mxu0 0.0
      %816 = vmatpush1.msra.mxu0 0.0
      %817 = vmatprep.subr.mxu0 0.0
      %818 = vmatpush1.msra.mxu0 0.0
      %819 = vmatprep.subr.mxu0 0.0
      %820 = vmatpush1.msra.mxu0 0.0
      %821 = vmatprep.subr.mxu0 0.0
      %822 = vmatpush1.msra.mxu0 0.0
      %823 = vmatprep.subr.mxu0 0.0
      %824 = vmatpush1.msra.mxu0 0.0
      %825 = vmatprep.subr.mxu0 0.0
      %826 = vmatpush1.msra.mxu0 0.0
      %827 = vmatprep.subr.mxu0 0.0
      %828 = vmatpush1.msra.mxu0 0.0
      %829 = vmatprep.subr.mxu0 0.0
      %830 = vmatpush1.msra.mxu0 0.0
      %831 = vmatprep.subr.mxu0 0.0
      %832 = vmatpush1.msra.mxu0 0.0
      %833 = vmatprep.subr.mxu0 0.0
      %834 = vmatpush1.msra.mxu0 0.0
      %835 = vmatprep.subr.mxu0 0.0
      %836 = vmatpush1.msra.mxu0 0.0
      %837 = vmatprep.subr.mxu0 0.0
      %838 = vmatpush1.msra.mxu0 0.0
      %839 = vmatprep.subr.mxu0 0.0
      %840 = vmatpush1.msra.mxu0 0.0
      %841 = vmatprep.subr.mxu0 0.0
      %842 = vmatpush1.msra.mxu0 0.0
      %843 = vmatprep.subr.mxu0 0.0
      %844 = vmatpush1.msra.mxu0 0.0
      %845 = vmatprep.subr.mxu0 0.0
      %846 = vmatpush1.msra.mxu0 0.0
      %847 = vmatprep.mubr.f32.mxu0 0.0
      %848 = vmatmul.mubr.f32.gmra.mrb[0].mxu0 %v781
      %v849 = vpop.f32.mrb[0].mxu0
      %v850 = vadd.f32 0.0, %v849
      %v851 = vpop.f32.mrb[0].mxu0
      %852 = vdwg.mxu0
      %854 = vrot.lane.b32.xlu0 %v850, 16
      %v855 = vpop.permute.xlu0 %854
      %v857 = vsel %vm521, %v683, %v855
      %v858 = vpack.c.bf16 %v857, %v857
      %v859 = vld [vmem:[%s5] sm:$0xf]
      %v860 = vld [vmem:[%s5 + $0x4] sm:$0xf]
      %v861 = vld [vmem:[%s5 + $0x8] sm:$0xf]
      %v862 = vld [vmem:[%s5 + $0xc] sm:$0xf]
      %v863 = vlaneseq
      %v864 = vshrl.u32 %v863, 7
      %v865 = vsub.s32 0, %v864
      %v866 = vrot.slane %v450, %v865
      %v871 = vunpack.c.l.b16 %v859
      %v872 = vunpack.c.l.b16 %v860
      %v873 = vunpack.c.l.b16 %v861
      %v874 = vunpack.c.l.b16 %v862
      %v875 = vpack.c.b16 %v872, %v871
      %v876 = vpack.c.b16 %v874, %v873
      %v880 = vsel %vm425, %v858, 0
      %882 = vmatprep.subr.bf16.mxu0 0
      %883 = vmatpush1.bf16.msra.mxu0 %v875
      %884 = vmatprep.subr.bf16.mxu0 0
      %885 = vmatpush1.bf16.msra.mxu0 %v876
      %886 = vmatprep.subr.bf16.mxu0 0
      %887 = vmatpush1.bf16.msra.mxu0 0
      %888 = vmatprep.subr.bf16.mxu0 0
      %889 = vmatpush1.bf16.msra.mxu0 0
      %890 = vmatprep.subr.bf16.mxu0 0
      %891 = vmatpush1.bf16.msra.mxu0 0
      %892 = vmatprep.subr.bf16.mxu0 0
      %893 = vmatpush1.bf16.msra.mxu0 0
      %894 = vmatprep.subr.bf16.mxu0 0
      %895 = vmatpush1.bf16.msra.mxu0 0
      %896 = vmatprep.subr.bf16.mxu0 0
      %897 = vmatpush1.bf16.msra.mxu0 0
      %898 = vmatprep.subr.bf16.mxu0 0
      %899 = vmatpush1.bf16.msra.mxu0 0
      %900 = vmatprep.subr.bf16.mxu0 0
      %901 = vmatpush1.bf16.msra.mxu0 0
      %902 = vmatprep.subr.bf16.mxu0 0
      %903 = vmatpush1.bf16.msra.mxu0 0
      %904 = vmatprep.subr.bf16.mxu0 0
      %905 = vmatpush1.bf16.msra.mxu0 0
      %906 = vmatprep.subr.bf16.mxu0 0
      %907 = vmatpush1.bf16.msra.mxu0 0
      %908 = vmatprep.subr.bf16.mxu0 0
      %909 = vmatpush1.bf16.msra.mxu0 0
      %910 = vmatprep.subr.bf16.mxu0 0
      %911 = vmatpush1.bf16.msra.mxu0 0
      %912 = vmatprep.subr.bf16.mxu0 0
      %913 = vmatpush1.bf16.msra.mxu0 0
      %914 = vmatprep.mubr.bf16.mxu0 0
      %915 = vmatmul.mubr.bf16.gmra.mrb[0].mxu0 %v880
      %v916 = vpop.f32.mrb[0].mxu0
      %v917 = vadd.f32 %v866, %v916
      %v918 = vpop.f32.mrb[0].mxu0
      %v919 = vpop.f32.mrb[0].mxu0
      %v920 = vpop.f32.mrb[0].mxu0
      %921 = vdwg.mxu0
      %v922 = vadd.f32 %v449, %v917
      %v923 = vsel %vm425, %v922, 0.0
      %924 = vadd.xlane.f32.xlu0 %v923
      %v925 = vpop.xlane.xlu0 %924
      %v926 = vmul.f32 %v925, %v429
      %v927 = vsub.f32 %v922, %v926
      %v928 = vmul.f32 %v927, %v927
      %v929 = vsel %vm425, %v928, 0.0
      %930 = vadd.xlane.f32.xlu0 %v929
      %v931 = vpop.xlane.xlu0 %930
      %v932 = vmul.f32 %v931, %v429
      %v933 = vadd.f32 %v932, 1e-12
      %v934 = vrsqrt.pop %v933
      %v935 = vmul.f32 %v927, %v934
      %v936 = vlaneseq
      %v937 = vshrl.u32 %v936, 7
      %v938 = vsub.s32 1, %v937
      %v939 = vrot.slane %v450, %v938
      %v940 = vmul.f32 %v935, %v939
      %v941 = vlaneseq
      %v942 = vshrl.u32 %v941, 7
      %v943 = vsub.s32 2, %v942
      %v944 = vrot.slane %v450, %v943
      %v945 = vadd.f32 %v940, %v944
      %v946 = vpack.c.bf16 %v945, %v945
      %v947 = vld [vmem:[%s6] sm:$0xf]
      %v948 = vld [vmem:[%s6 + $0x4] sm:$0xf]
      %v949 = vld [vmem:[%s6 + $0x8] sm:$0xf]
      %v950 = vld [vmem:[%s6 + $0xc] sm:$0xf]
      %v951 = vld [vmem:[%s7] sm:$0x1]
      %v953 = vlaneseq
      %v954 = vshrl.u32 %v953, 7
      %v955 = vsub.s32 0, %v954
      %v956 = vrot.slane %v951, %v955
      %v962 = vunpack.c.l.b16 %v947
      %v963 = vunpack.c.l.b16 %v948
      %v964 = vunpack.c.l.b16 %v949
      %v965 = vunpack.c.l.b16 %v950
      %v966 = vpack.c.b16 %v963, %v962
      %v967 = vpack.c.b16 %v965, %v964
      %v971 = vsel %vm425, %v946, 0
      %973 = vmatprep.subr.bf16.mxu0 0
      %974 = vmatpush1.bf16.msra.mxu0 %v966
      %975 = vmatprep.subr.bf16.mxu0 0
      %976 = vmatpush1.bf16.msra.mxu0 %v967
      %977 = vmatprep.subr.bf16.mxu0 0
      %978 = vmatpush1.bf16.msra.mxu0 0
      %979 = vmatprep.subr.bf16.mxu0 0
      %980 = vmatpush1.bf16.msra.mxu0 0
      %981 = vmatprep.subr.bf16.mxu0 0
      %982 = vmatpush1.bf16.msra.mxu0 0
      %983 = vmatprep.subr.bf16.mxu0 0
      %984 = vmatpush1.bf16.msra.mxu0 0
      %985 = vmatprep.subr.bf16.mxu0 0
      %986 = vmatpush1.bf16.msra.mxu0 0
      %987 = vmatprep.subr.bf16.mxu0 0
      %988 = vmatpush1.bf16.msra.mxu0 0
      %989 = vmatprep.subr.bf16.mxu0 0
      %990 = vmatpush1.bf16.msra.mxu0 0
      %991 = vmatprep.subr.bf16.mxu0 0
      %992 = vmatpush1.bf16.msra.mxu0 0
      %993 = vmatprep.subr.bf16.mxu0 0
      %994 = vmatpush1.bf16.msra.mxu0 0
      %995 = vmatprep.subr.bf16.mxu0 0
      %996 = vmatpush1.bf16.msra.mxu0 0
      %997 = vmatprep.subr.bf16.mxu0 0
      %998 = vmatpush1.bf16.msra.mxu0 0
      %999 = vmatprep.subr.bf16.mxu0 0
      %1000 = vmatpush1.bf16.msra.mxu0 0
      %1001 = vmatprep.subr.bf16.mxu0 0
      %1002 = vmatpush1.bf16.msra.mxu0 0
      %1003 = vmatprep.subr.bf16.mxu0 0
      %1004 = vmatpush1.bf16.msra.mxu0 0
      %1005 = vmatprep.mubr.bf16.mxu0 0
      %1006 = vmatmul.mubr.bf16.gmra.mrb[0].mxu0 %v971
      %v1007 = vpop.f32.mrb[0].mxu0
      %v1008 = vadd.f32 %v956, %v1007
      %v1009 = vpop.f32.mrb[0].mxu0
      %v1010 = vpop.f32.mrb[0].mxu0
      %v1011 = vpop.f32.mrb[0].mxu0
      %1012 = vdwg.mxu0
      %v1013 = vmul.f32 %v1008, 0.5
      %v1014 = vmul.f32 %v1008, 0.044715
      %v1015 = vmul.f32 %v1014, %v1008
      %v1016 = vmul.f32 %v1015, %v1008
      %v1017 = vadd.f32 %v1008, %v1016
      %v1018 = vmul.f32 %v1017, 0.7978846
      %v1019 = vtanh.pop %v1018
      %v1020 = vadd.f32 %v1019, 1.0
      %v1021 = vmul.f32 %v1013, %v1020
      %v1022 = vpack.c.bf16 %v1021, %v1021
      %v1023 = vld [vmem:[%s8] sm:$0xf]
      %v1024 = vld [vmem:[%s8 + $0x4] sm:$0xf]
      %v1025 = vld [vmem:[%s8 + $0x8] sm:$0xf]
      %v1026 = vld [vmem:[%s8 + $0xc] sm:$0xf]
      %v1027 = vld [vmem:[%s8 + $0x10] sm:$0xf]
      %v1028 = vld [vmem:[%s8 + $0x14] sm:$0xf]
      %v1029 = vld [vmem:[%s8 + $0x18] sm:$0xf]
      %v1030 = vld [vmem:[%s8 + $0x1c] sm:$0xf]
      %v1031 = vlaneseq
      %v1032 = vshrl.u32 %v1031, 7
      %v1033 = vsub.s32 3, %v1032
      %v1034 = vrot.slane %v450, %v1033
      %v1043 = vunpack.c.l.b16 %v1023
      %v1044 = vunpack.c.l.b16 %v1024
      %v1045 = vunpack.c.l.b16 %v1025
      %v1046 = vunpack.c.l.b16 %v1026
      %v1047 = vunpack.c.l.b16 %v1027
      %v1048 = vunpack.c.l.b16 %v1028
      %v1049 = vunpack.c.l.b16 %v1029
      %v1050 = vunpack.c.l.b16 %v1030
      %v1051 = vpack.c.b16 %v1044, %v1043
      %v1052 = vpack.c.b16 %v1046, %v1045
      %v1053 = vpack.c.b16 %v1048, %v1047
      %v1054 = vpack.c.b16 %v1050, %v1049
      %vm1059 = vcmask 523264
      %v1061 = vsel %vm1059, %v1022, 0
      %1063 = vmatprep.subr.bf16.mxu0 0
      %1064 = vmatpush1.bf16.msra.mxu0 %v1051
      %1065 = vmatprep.subr.bf16.mxu0 0
      %1066 = vmatpush1.bf16.msra.mxu0 %v1052
      %1067 = vmatprep.subr.bf16.mxu0 0
      %1068 = vmatpush1.bf16.msra.mxu0 %v1053
      %1069 = vmatprep.subr.bf16.mxu0 0
      %1070 = vmatpush1.bf16.msra.mxu0 %v1054
      %1071 = vmatprep.subr.bf16.mxu0 0
      %1072 = vmatpush1.bf16.msra.mxu0 0
      %1073 = vmatprep.subr.bf16.mxu0 0
      %1074 = vmatpush1.bf16.msra.mxu0 0
      %1075 = vmatprep.subr.bf16.mxu0 0
      %1076 = vmatpush1.bf16.msra.mxu0 0
      %1077 = vmatprep.subr.bf16.mxu0 0
      %1078 = vmatpush1.bf16.msra.mxu0 0
      %1079 = vmatprep.subr.bf16.mxu0 0
      %1080 = vmatpush1.bf16.msra.mxu0 0
      %1081 = vmatprep.subr.bf16.mxu0 0
      %1082 = vmatpush1.bf16.msra.mxu0 0
      %1083 = vmatprep.subr.bf16.mxu0 0
      %1084 = vmatpush1.bf16.msra.mxu0 0
      %1085 = vmatprep.subr.bf16.mxu0 0
      %1086 = vmatpush1.bf16.msra.mxu0 0
      %1087 = vmatprep.subr.bf16.mxu0 0
      %1088 = vmatpush1.bf16.msra.mxu0 0
      %1089 = vmatprep.subr.bf16.mxu0 0
      %1090 = vmatpush1.bf16.msra.mxu0 0
      %1091 = vmatprep.subr.bf16.mxu0 0
      %1092 = vmatpush1.bf16.msra.mxu0 0
      %1093 = vmatprep.subr.bf16.mxu0 0
      %1094 = vmatpush1.bf16.msra.mxu0 0
      %1095 = vmatprep.mubr.bf16.mxu0 0
      %1096 = vmatmul.mubr.bf16.gmra.mrb[0].mxu0 %v1061
      %v1097 = vpop.f32.mrb[0].mxu0
      %v1098 = vadd.f32 %v1034, %v1097
      %v1099 = vpop.f32.mrb[0].mxu0
      %v1100 = vpop.f32.mrb[0].mxu0
      %v1101 = vpop.f32.mrb[0].mxu0
      %1102 = vdwg.mxu0
      %v1103 = vadd.f32 %v945, %v1098
      %v1104 = vsel %vm425, %v1103, 0.0
      %1105 = vadd.xlane.f32.xlu0 %v1104
      %v1106 = vpop.xlane.xlu0 %1105
      %v1107 = vmul.f32 %v1106, %v429
      %v1108 = vsub.f32 %v1103, %v1107
      %v1109 = vmul.f32 %v1108, %v1108
      %v1110 = vsel %vm425, %v1109, 0.0
      %1111 = vadd.xlane.f32.xlu0 %v1110
      %v1112 = vpop.xlane.xlu0 %1111
      %v1113 = vmul.f32 %v1112, %v429
      %v1114 = vadd.f32 %v1113, 1e-12
      %v1115 = vrsqrt.pop %v1114
      %v1116 = vmul.f32 %v1108, %v1115
      %v1117 = vlaneseq
      %v1118 = vshrl.u32 %v1117, 7
      %v1119 = vsub.s32 4, %v1118
      %v1120 = vrot.slane %v450, %v1119
      %v1121 = vmul.f32 %v1116, %v1120
      %v1122 = vlaneseq
      %v1123 = vshrl.u32 %v1122, 7
      %v1124 = vsub.s32 5, %v1123
      %v1125 = vrot.slane %v450, %v1124
      %v1126 = vadd.f32 %v1121, %v1125
      %s1127 = scalar_lea.vmem %s9, 8
      %v1128 = vld [vmem:[%s1127] sm:$0x3f]
      %v1129 = vpack.c.bf16 %v1126, %v1126
      %s1130 = scalar_lea.vmem %s3, 16
      %v1131 = vld [vmem:[%s1130] sm:$0xf]
      %v1132 = vld [vmem:[%s1130 + $0x4] sm:$0xf]
      %v1133 = vld [vmem:[%s1130 + $0x8] sm:$0xf]
      %v1134 = vld [vmem:[%s1130 + $0xc] sm:$0xf]
      %s1135 = scalar_lea.vmem %s4, 1
      %v1136 = vld [vmem:[%s1135] sm:$0x1]
      %v1138 = vlaneseq
      %v1139 = vshrl.u32 %v1138, 7
      %v1140 = vsub.s32 0, %v1139
      %v1141 = vrot.slane %v1136, %v1140
      %v1147 = vunpack.c.l.b16 %v1131
      %v1148 = vunpack.c.l.b16 %v1132
      %v1149 = vunpack.c.l.b16 %v1133
      %v1150 = vunpack.c.l.b16 %v1134
      %v1151 = vpack.c.b16 %v1148, %v1147
      %v1152 = vpack.c.b16 %v1150, %v1149
      %v1156 = vsel %vm425, %v1129, 0
      %1158 = vmatprep.subr.bf16.mxu0 0
      %1159 = vmatpush1.bf16.msra.mxu0 %v1151
      %1160 = vmatprep.subr.bf16.mxu0 0
      %1161 = vmatpush1.bf16.msra.mxu0 %v1152
      %1162 = vmatprep.subr.bf16.mxu0 0
      %1163 = vmatpush1.bf16.msra.mxu0 0
      %1164 = vmatprep.subr.bf16.mxu0 0
      %1165 = vmatpush1.bf16.msra.mxu0 0
      %1166 = vmatprep.subr.bf16.mxu0 0
      %1167 = vmatpush1.bf16.msra.mxu0 0
      %1168 = vmatprep.subr.bf16.mxu0 0
      %1169 = vmatpush1.bf16.msra.mxu0 0
      %1170 = vmatprep.subr.bf16.mxu0 0
      %1171 = vmatpush1.bf16.msra.mxu0 0
      %1172 = vmatprep.subr.bf16.mxu0 0
      %1173 = vmatpush1.bf16.msra.mxu0 0
      %1174 = vmatprep.subr.bf16.mxu0 0
      %1175 = vmatpush1.bf16.msra.mxu0 0
      %1176 = vmatprep.subr.bf16.mxu0 0
      %1177 = vmatpush1.bf16.msra.mxu0 0
      %1178 = vmatprep.subr.bf16.mxu0 0
      %1179 = vmatpush1.bf16.msra.mxu0 0
      %1180 = vmatprep.subr.bf16.mxu0 0
      %1181 = vmatpush1.bf16.msra.mxu0 0
      %1182 = vmatprep.subr.bf16.mxu0 0
      %1183 = vmatpush1.bf16.msra.mxu0 0
      %1184 = vmatprep.subr.bf16.mxu0 0
      %1185 = vmatpush1.bf16.msra.mxu0 0
      %1186 = vmatprep.subr.bf16.mxu0 0
      %1187 = vmatpush1.bf16.msra.mxu0 0
      %1188 = vmatprep.subr.bf16.mxu0 0
      %1189 = vmatpush1.bf16.msra.mxu0 0
      %1190 = vmatprep.mubr.bf16.mxu0 0
      %1191 = vmatmul.mubr.bf16.gmra.mrb[0].mxu0 %v1156
      %v1192 = vpop.f32.mrb[0].mxu0
      %v1193 = vadd.f32 %v1141, %v1192
      %v1194 = vpop.f32.mrb[0].mxu0
      %v1195 = vpop.f32.mrb[0].mxu0
      %v1196 = vpop.f32.mrb[0].mxu0
      %1197 = vdwg.mxu0
      %1199 = vrot.lane.b32.xlu0 %v1193, 96
      %v1200 = vpop.permute.xlu0 %1199
      %v1201 = vsel %vm521, %v1193, 0
      %v1203 = vsel %vm521, %v1200, 0
      %1205 = vmatprep.subr.mxu0 0.0
      %1206 = vmatpush1.xpose.msra.mxu0 %v1203
      %1207 = vmatprep.subr.mxu0 0.0
      %1208 = vmatpush1.xpose.msra.mxu0 0.0
      %1209 = vmatprep.subr.mxu0 0.0
      %1210 = vmatpush1.xpose.msra.mxu0 0.0
      %1211 = vmatprep.subr.mxu0 0.0
      %1212 = vmatpush1.xpose.msra.mxu0 0.0
      %1213 = vmatprep.subr.mxu0 0.0
      %1214 = vmatpush1.xpose.msra.mxu0 0.0
      %1215 = vmatprep.subr.mxu0 0.0
      %1216 = vmatpush1.xpose.msra.mxu0 0.0
      %1217 = vmatprep.subr.mxu0 0.0
      %1218 = vmatpush1.xpose.msra.mxu0 0.0
      %1219 = vmatprep.subr.mxu0 0.0
      %1220 = vmatpush1.xpose.msra.mxu0 0.0
      %1221 = vmatprep.subr.mxu0 0.0
      %1222 = vmatpush1.xpose.msra.mxu0 0.0
      %1223 = vmatprep.subr.mxu0 0.0
      %1224 = vmatpush1.xpose.msra.mxu0 0.0
      %1225 = vmatprep.subr.mxu0 0.0
      %1226 = vmatpush1.xpose.msra.mxu0 0.0
      %1227 = vmatprep.subr.mxu0 0.0
      %1228 = vmatpush1.xpose.msra.mxu0 0.0
      %1229 = vmatprep.subr.mxu0 0.0
      %1230 = vmatpush1.xpose.msra.mxu0 0.0
      %1231 = vmatprep.subr.mxu0 0.0
      %1232 = vmatpush1.xpose.msra.mxu0 0.0
      %1233 = vmatprep.subr.mxu0 0.0
      %1234 = vmatpush1.xpose.msra.mxu0 0.0
      %1235 = vmatprep.subr.mxu0 0.0
      %1236 = vmatpush1.xpose.msra.mxu0 0.0
      %1237 = vmatprep.subr.mxu0 0.0
      %1238 = vmatpush1.xpose.msra.mxu0 0.0
      %1239 = vmatprep.subr.mxu0 0.0
      %1240 = vmatpush1.xpose.msra.mxu0 0.0
      %1241 = vmatprep.subr.mxu0 0.0
      %1242 = vmatpush1.xpose.msra.mxu0 0.0
      %1243 = vmatprep.subr.mxu0 0.0
      %1244 = vmatpush1.xpose.msra.mxu0 0.0
      %1245 = vmatprep.subr.mxu0 0.0
      %1246 = vmatpush1.xpose.msra.mxu0 0.0
      %1247 = vmatprep.subr.mxu0 0.0
      %1248 = vmatpush1.xpose.msra.mxu0 0.0
      %1249 = vmatprep.subr.mxu0 0.0
      %1250 = vmatpush1.xpose.msra.mxu0 0.0
      %1251 = vmatprep.subr.mxu0 0.0
      %1252 = vmatpush1.xpose.msra.mxu0 0.0
      %1253 = vmatprep.subr.mxu0 0.0
      %1254 = vmatpush1.xpose.msra.mxu0 0.0
      %1255 = vmatprep.subr.mxu0 0.0
      %1256 = vmatpush1.xpose.msra.mxu0 0.0
      %1257 = vmatprep.subr.mxu0 0.0
      %1258 = vmatpush1.xpose.msra.mxu0 0.0
      %1259 = vmatprep.subr.mxu0 0.0
      %1260 = vmatpush1.xpose.msra.mxu0 0.0
      %1261 = vmatprep.subr.mxu0 0.0
      %1262 = vmatpush1.xpose.msra.mxu0 0.0
      %1263 = vmatprep.subr.mxu0 0.0
      %1264 = vmatpush1.xpose.msra.mxu0 0.0
      %1265 = vmatprep.subr.mxu0 0.0
      %1266 = vmatpush1.xpose.msra.mxu0 0.0
      %1267 = vmatprep.subr.mxu0 0.0
      %1268 = vmatpush1.xpose.msra.mxu0 0.0
      %1269 = vmatprep.mubr.f32.mxu0 0.0
      %1270 = vmatmul.mubr.f32.gmra.mrb[0].mxu0 %v1201
      %v1271 = vpop.f32.mrb[0].mxu0
      %v1272 = vadd.f32 0.0, %v1271
      %v1273 = vpop.f32.mrb[0].mxu0
      %1274 = vdwg.mxu0
      %v1275 = vmul.f32 %v1272, 0.25
      %v1276 = vadd.f32 %v1275, %v422
      %v1277 = vsel %vm598, %v1276, -inf
      %1278 = vmax.xlane.f32.xlu0 %v1277
      %v1279 = vpop.xlane.xlu0 %1278
      %v1280 = vsub.f32 %v1276, %v1279
      %v1281 = vmul.f32 %v1280, 1.442695
      %v1282 = vpow.pop %v1281
      %v1283 = vsel %vm598, %v1282, 0.0
      %1284 = vadd.xlane.f32.xlu0 %v1283
      %v1285 = vpop.xlane.xlu0 %1284
      %v1286 = vrcp.pop %v1285
      %v1287 = vmul.f32 %v1282, %v1286
      %1288 = vrot.lane.b32.xlu0 %v1193, 64
      %v1289 = vpop.permute.xlu0 %1288
      %v1292 = vsel %vm598, %v1287, 0
      %1294 = vmatprep.subr.mxu0 0.0
      %1295 = vmatpush1.msra.mxu0 %v1289
      %1296 = vmatprep.subr.mxu0 0.0
      %1297 = vmatpush1.msra.mxu0 0.0
      %1298 = vmatprep.subr.mxu0 0.0
      %1299 = vmatpush1.msra.mxu0 0.0
      %1300 = vmatprep.subr.mxu0 0.0
      %1301 = vmatpush1.msra.mxu0 0.0
      %1302 = vmatprep.subr.mxu0 0.0
      %1303 = vmatpush1.msra.mxu0 0.0
      %1304 = vmatprep.subr.mxu0 0.0
      %1305 = vmatpush1.msra.mxu0 0.0
      %1306 = vmatprep.subr.mxu0 0.0
      %1307 = vmatpush1.msra.mxu0 0.0
      %1308 = vmatprep.subr.mxu0 0.0
      %1309 = vmatpush1.msra.mxu0 0.0
      %1310 = vmatprep.subr.mxu0 0.0
      %1311 = vmatpush1.msra.mxu0 0.0
      %1312 = vmatprep.subr.mxu0 0.0
      %1313 = vmatpush1.msra.mxu0 0.0
      %1314 = vmatprep.subr.mxu0 0.0
      %1315 = vmatpush1.msra.mxu0 0.0
      %1316 = vmatprep.subr.mxu0 0.0
      %1317 = vmatpush1.msra.mxu0 0.0
      %1318 = vmatprep.subr.mxu0 0.0
      %1319 = vmatpush1.msra.mxu0 0.0
      %1320 = vmatprep.subr.mxu0 0.0
      %1321 = vmatpush1.msra.mxu0 0.0
      %1322 = vmatprep.subr.mxu0 0.0
      %1323 = vmatpush1.msra.mxu0 0.0
      %1324 = vmatprep.subr.mxu0 0.0
      %1325 = vmatpush1.msra.mxu0 0.0
      %1326 = vmatprep.subr.mxu0 0.0
      %1327 = vmatpush1.msra.mxu0 0.0
      %1328 = vmatprep.subr.mxu0 0.0
      %1329 = vmatpush1.msra.mxu0 0.0
      %1330 = vmatprep.subr.mxu0 0.0
      %1331 = vmatpush1.msra.mxu0 0.0
      %1332 = vmatprep.subr.mxu0 0.0
      %1333 = vmatpush1.msra.mxu0 0.0
      %1334 = vmatprep.subr.mxu0 0.0
      %1335 = vmatpush1.msra.mxu0 0.0
      %1336 = vmatprep.subr.mxu0 0.0
      %1337 = vmatpush1.msra.mxu0 0.0
      %1338 = vmatprep.subr.mxu0 0.0
      %1339 = vmatpush1.msra.mxu0 0.0
      %1340 = vmatprep.subr.mxu0 0.0
      %1341 = vmatpush1.msra.mxu0 0.0
      %1342 = vmatprep.subr.mxu0 0.0
      %1343 = vmatpush1.msra.mxu0 0.0
      %1344 = vmatprep.subr.mxu0 0.0
      %1345 = vmatpush1.msra.mxu0 0.0
      %1346 = vmatprep.subr.mxu0 0.0
      %1347 = vmatpush1.msra.mxu0 0.0
      %1348 = vmatprep.subr.mxu0 0.0
      %1349 = vmatpush1.msra.mxu0 0.0
      %1350 = vmatprep.subr.mxu0 0.0
      %1351 = vmatpush1.msra.mxu0 0.0
      %1352 = vmatprep.subr.mxu0 0.0
      %1353 = vmatpush1.msra.mxu0 0.0
      %1354 = vmatprep.subr.mxu0 0.0
      %1355 = vmatpush1.msra.mxu0 0.0
      %1356 = vmatprep.subr.mxu0 0.0
      %1357 = vmatpush1.msra.mxu0 0.0
      %1358 = vmatprep.mubr.f32.mxu0 0.0
      %1359 = vmatmul.mubr.f32.gmra.mrb[0].mxu0 %v1292
      %v1360 = vpop.f32.mrb[0].mxu0
      %v1361 = vadd.f32 0.0, %v1360
      %v1362 = vpop.f32.mrb[0].mxu0
      %1363 = vdwg.mxu0
      %1364 = vrot.lane.b32.xlu0 %v1193, 112
      %v1365 = vpop.permute.xlu0 %1364
      %1366 = vrot.lane.b32.xlu0 %v1193, 80
      %v1367 = vpop.permute.xlu0 %1366
      %v1368 = vsel %vm521, %v1365, 0
      %v1370 = vsel %vm521, %v1367, 0
      %1372 = vmatprep.subr.mxu0 0.0
      %1373 = vmatpush1.xpose.msra.mxu0 %v1370
      %1374 = vmatprep.subr.mxu0 0.0
      %1375 = vmatpush1.xpose.msra.mxu0 0.0
      %1376 = vmatprep.subr.mxu0 0.0
      %1377 = vmatpush1.xpose.msra.mxu0 0.0
      %1378 = vmatprep.subr.mxu0 0.0
      %1379 = vmatpush1.xpose.msra.mxu0 0.0
      %1380 = vmatprep.subr.mxu0 0.0
      %1381 = vmatpush1.xpose.msra.mxu0 0.0
      %1382 = vmatprep.subr.mxu0 0.0
      %1383 = vmatpush1.xpose.msra.mxu0 0.0
      %1384 = vmatprep.subr.mxu0 0.0
      %1385 = vmatpush1.xpose.msra.mxu0 0.0
      %1386 = vmatprep.subr.mxu0 0.0
      %1387 = vmatpush1.xpose.msra.mxu0 0.0
      %1388 = vmatprep.subr.mxu0 0.0
      %1389 = vmatpush1.xpose.msra.mxu0 0.0
      %1390 = vmatprep.subr.mxu0 0.0
      %1391 = vmatpush1.xpose.msra.mxu0 0.0
      %1392 = vmatprep.subr.mxu0 0.0
      %1393 = vmatpush1.xpose.msra.mxu0 0.0
      %1394 = vmatprep.subr.mxu0 0.0
      %1395 = vmatpush1.xpose.msra.mxu0 0.0
      %1396 = vmatprep.subr.mxu0 0.0
      %1397 = vmatpush1.xpose.msra.mxu0 0.0
      %1398 = vmatprep.subr.mxu0 0.0
      %1399 = vmatpush1.xpose.msra.mxu0 0.0
      %1400 = vmatprep.subr.mxu0 0.0
      %1401 = vmatpush1.xpose.msra.mxu0 0.0
      %1402 = vmatprep.subr.mxu0 0.0
      %1403 = vmatpush1.xpose.msra.mxu0 0.0
      %1404 = vmatprep.subr.mxu0 0.0
      %1405 = vmatpush1.xpose.msra.mxu0 0.0
      %1406 = vmatprep.subr.mxu0 0.0
      %1407 = vmatpush1.xpose.msra.mxu0 0.0
      %1408 = vmatprep.subr.mxu0 0.0
      %1409 = vmatpush1.xpose.msra.mxu0 0.0
      %1410 = vmatprep.subr.mxu0 0.0
      %1411 = vmatpush1.xpose.msra.mxu0 0.0
      %1412 = vmatprep.subr.mxu0 0.0
      %1413 = vmatpush1.xpose.msra.mxu0 0.0
      %1414 = vmatprep.subr.mxu0 0.0
      %1415 = vmatpush1.xpose.msra.mxu0 0.0
      %1416 = vmatprep.subr.mxu0 0.0
      %1417 = vmatpush1.xpose.msra.mxu0 0.0
      %1418 = vmatprep.subr.mxu0 0.0
      %1419 = vmatpush1.xpose.msra.mxu0 0.0
      %1420 = vmatprep.subr.mxu0 0.0
      %1421 = vmatpush1.xpose.msra.mxu0 0.0
      %1422 = vmatprep.subr.mxu0 0.0
      %1423 = vmatpush1.xpose.msra.mxu0 0.0
      %1424 = vmatprep.subr.mxu0 0.0
      %1425 = vmatpush1.xpose.msra.mxu0 0.0
      %1426 = vmatprep.subr.mxu0 0.0
      %1427 = vmatpush1.xpose.msra.mxu0 0.0
      %1428 = vmatprep.subr.mxu0 0.0
      %1429 = vmatpush1.xpose.msra.mxu0 0.0
      %1430 = vmatprep.subr.mxu0 0.0
      %1431 = vmatpush1.xpose.msra.mxu0 0.0
      %1432 = vmatprep.subr.mxu0 0.0
      %1433 = vmatpush1.xpose.msra.mxu0 0.0
      %1434 = vmatprep.subr.mxu0 0.0
      %1435 = vmatpush1.xpose.msra.mxu0 0.0
      %1436 = vmatprep.mubr.f32.mxu0 0.0
      %1437 = vmatmul.mubr.f32.gmra.mrb[0].mxu0 %v1368
      %v1438 = vpop.f32.mrb[0].mxu0
      %v1439 = vadd.f32 0.0, %v1438
      %v1440 = vpop.f32.mrb[0].mxu0
      %1441 = vdwg.mxu0
      %v1442 = vmul.f32 %v1439, 0.25
      %v1443 = vadd.f32 %v1442, %v422
      %v1444 = vsel %vm598, %v1443, -inf
      %1445 = vmax.xlane.f32.xlu0 %v1444
      %v1446 = vpop.xlane.xlu0 %1445
      %v1447 = vsub.f32 %v1443, %v1446
      %v1448 = vmul.f32 %v1447, 1.442695
      %v1449 = vpow.pop %v1448
      %v1450 = vsel %vm598, %v1449, 0.0
      %1451 = vadd.xlane.f32.xlu0 %v1450
      %v1452 = vpop.xlane.xlu0 %1451
      %v1453 = vrcp.pop %v1452
      %v1454 = vmul.f32 %v1449, %v1453
      %1455 = vrot.lane.b32.xlu0 %v1193, 48
      %v1456 = vpop.permute.xlu0 %1455
      %v1459 = vsel %vm598, %v1454, 0
      %1461 = vmatprep.subr.mxu0 0.0
      %1462 = vmatpush1.msra.mxu0 %v1456
      %1463 = vmatprep.subr.mxu0 0.0
      %1464 = vmatpush1.msra.mxu0 0.0
      %1465 = vmatprep.subr.mxu0 0.0
      %1466 = vmatpush1.msra.mxu0 0.0
      %1467 = vmatprep.subr.mxu0 0.0
      %1468 = vmatpush1.msra.mxu0 0.0
      %1469 = vmatprep.subr.mxu0 0.0
      %1470 = vmatpush1.msra.mxu0 0.0
      %1471 = vmatprep.subr.mxu0 0.0
      %1472 = vmatpush1.msra.mxu0 0.0
      %1473 = vmatprep.subr.mxu0 0.0
      %1474 = vmatpush1.msra.mxu0 0.0
      %1475 = vmatprep.subr.mxu0 0.0
      %1476 = vmatpush1.msra.mxu0 0.0
      %1477 = vmatprep.subr.mxu0 0.0
      %1478 = vmatpush1.msra.mxu0 0.0
      %1479 = vmatprep.subr.mxu0 0.0
      %1480 = vmatpush1.msra.mxu0 0.0
      %1481 = vmatprep.subr.mxu0 0.0
      %1482 = vmatpush1.msra.mxu0 0.0
      %1483 = vmatprep.subr.mxu0 0.0
      %1484 = vmatpush1.msra.mxu0 0.0
      %1485 = vmatprep.subr.mxu0 0.0
      %1486 = vmatpush1.msra.mxu0 0.0
      %1487 = vmatprep.subr.mxu0 0.0
      %1488 = vmatpush1.msra.mxu0 0.0
      %1489 = vmatprep.subr.mxu0 0.0
      %1490 = vmatpush1.msra.mxu0 0.0
      %1491 = vmatprep.subr.mxu0 0.0
      %1492 = vmatpush1.msra.mxu0 0.0
      %1493 = vmatprep.subr.mxu0 0.0
      %1494 = vmatpush1.msra.mxu0 0.0
      %1495 = vmatprep.subr.mxu0 0.0
      %1496 = vmatpush1.msra.mxu0 0.0
      %1497 = vmatprep.subr.mxu0 0.0
      %1498 = vmatpush1.msra.mxu0 0.0
      %1499 = vmatprep.subr.mxu0 0.0
      %1500 = vmatpush1.msra.mxu0 0.0
      %1501 = vmatprep.subr.mxu0 0.0
      %1502 = vmatpush1.msra.mxu0 0.0
      %1503 = vmatprep.subr.mxu0 0.0
      %1504 = vmatpush1.msra.mxu0 0.0
      %1505 = vmatprep.subr.mxu0 0.0
      %1506 = vmatpush1.msra.mxu0 0.0
      %1507 = vmatprep.subr.mxu0 0.0
      %1508 = vmatpush1.msra.mxu0 0.0
      %1509 = vmatprep.subr.mxu0 0.0
      %1510 = vmatpush1.msra.mxu0 0.0
      %1511 = vmatprep.subr.mxu0 0.0
      %1512 = vmatpush1.msra.mxu0 0.0
      %1513 = vmatprep.subr.mxu0 0.0
      %1514 = vmatpush1.msra.mxu0 0.0
      %1515 = vmatprep.subr.mxu0 0.0
      %1516 = vmatpush1.msra.mxu0 0.0
      %1517 = vmatprep.subr.mxu0 0.0
      %1518 = vmatpush1.msra.mxu0 0.0
      %1519 = vmatprep.subr.mxu0 0.0
      %1520 = vmatpush1.msra.mxu0 0.0
      %1521 = vmatprep.subr.mxu0 0.0
      %1522 = vmatpush1.msra.mxu0 0.0
      %1523 = vmatprep.subr.mxu0 0.0
      %1524 = vmatpush1.msra.mxu0 0.0
      %1525 = vmatprep.mubr.f32.mxu0 0.0
      %1526 = vmatmul.mubr.f32.gmra.mrb[0].mxu0 %v1459
      %v1527 = vpop.f32.mrb[0].mxu0
      %v1528 = vadd.f32 0.0, %v1527
      %v1529 = vpop.f32.mrb[0].mxu0
      %1530 = vdwg.mxu0
      %1532 = vrot.lane.b32.xlu0 %v1528, 16
      %v1533 = vpop.permute.xlu0 %1532
      %v1535 = vsel %vm521, %v1361, %v1533
      %v1536 = vpack.c.bf16 %v1535, %v1535
      %s1537 = scalar_lea.vmem %s5, 16
      %v1538 = vld [vmem:[%s1537] sm:$0xf]
      %v1539 = vld [vmem:[%s1537 + $0x4] sm:$0xf]
      %v1540 = vld [vmem:[%s1537 + $0x8] sm:$0xf]
      %v1541 = vld [vmem:[%s1537 + $0xc] sm:$0xf]
      %v1542 = vlaneseq
      %v1543 = vshrl.u32 %v1542, 7
      %v1544 = vsub.s32 0, %v1543
      %v1545 = vrot.slane %v1128, %v1544
      %v1550 = vunpack.c.l.b16 %v1538
      %v1551 = vunpack.c.l.b16 %v1539
      %v1552 = vunpack.c.l.b16 %v1540
      %v1553 = vunpack.c.l.b16 %v1541
      %v1554 = vpack.c.b16 %v1551, %v1550
      %v1555 = vpack.c.b16 %v1553, %v1552
      %v1559 = vsel %vm425, %v1536, 0
      %1561 = vmatprep.subr.bf16.mxu0 0
      %1562 = vmatpush1.bf16.msra.mxu0 %v1554
      %1563 = vmatprep.subr.bf16.mxu0 0
      %1564 = vmatpush1.bf16.msra.mxu0 %v1555
      %1565 = vmatprep.subr.bf16.mxu0 0
      %1566 = vmatpush1.bf16.msra.mxu0 0
      %1567 = vmatprep.subr.bf16.mxu0 0
      %1568 = vmatpush1.bf16.msra.mxu0 0
      %1569 = vmatprep.subr.bf16.mxu0 0
      %1570 = vmatpush1.bf16.msra.mxu0 0
      %1571 = vmatprep.subr.bf16.mxu0 0
      %1572 = vmatpush1.bf16.msra.mxu0 0
      %1573 = vmatprep.subr.bf16.mxu0 0
      %1574 = vmatpush1.bf16.msra.mxu0 0
      %1575 = vmatprep.subr.bf16.mxu0 0
      %1576 = vmatpush1.bf16.msra.mxu0 0
      %1577 = vmatprep.subr.bf16.mxu0 0
      %1578 = vmatpush1.bf16.msra.mxu0 0
      %1579 = vmatprep.subr.bf16.mxu0 0
      %1580 = vmatpush1.bf16.msra.mxu0 0
      %1581 = vmatprep.subr.bf16.mxu0 0
      %1582 = vmatpush1.bf16.msra.mxu0 0
      %1583 = vmatprep.subr.bf16.mxu0 0
      %1584 = vmatpush1.bf16.msra.mxu0 0
      %1585 = vmatprep.subr.bf16.mxu0 0
      %1586 = vmatpush1.bf16.msra.mxu0 0
      %1587 = vmatprep.subr.bf16.mxu0 0
      %1588 = vmatpush1.bf16.msra.mxu0 0
      %1589 = vmatprep.subr.bf16.mxu0 0
      %1590 = vmatpush1.bf16.msra.mxu0 0
      %1591 = vmatprep.subr.bf16.mxu0 0
      %1592 = vmatpush1.bf16.msra.mxu0 0
      %1593 = vmatprep.mubr.bf16.mxu0 0
      %1594 = vmatmul.mubr.bf16.gmra.mrb[0].mxu0 %v1559
      %v1595 = vpop.f32.mrb[0].mxu0
      %v1596 = vadd.f32 %v1545, %v1595
      %v1597 = vpop.f32.mrb[0].mxu0
      %v1598 = vpop.f32.mrb[0].mxu0
      %v1599 = vpop.f32.mrb[0].mxu0
      %1600 = vdwg.mxu0
      %v1601 = vadd.f32 %v1126, %v1596
      %v1602 = vsel %vm425, %v1601, 0.0
      %1603 = vadd.xlane.f32.xlu0 %v1602
      %v1604 = vpop.xlane.xlu0 %1603
      %v1605 = vmul.f32 %v1604, %v429
      %v1606 = vsub.f32 %v1601, %v1605
      %v1607 = vmul.f32 %v1606, %v1606
      %v1608 = vsel %vm425, %v1607, 0.0
      %1609 = vadd.xlane.f32.xlu0 %v1608
      %v1610 = vpop.xlane.xlu0 %1609
      %v1611 = vmul.f32 %v1610, %v429
      %v1612 = vadd.f32 %v1611, 1e-12
      %v1613 = vrsqrt.pop %v1612
      %v1614 = vmul.f32 %v1606, %v1613
      %v1615 = vlaneseq
      %v1616 = vshrl.u32 %v1615, 7
      %v1617 = vsub.s32 1, %v1616
      %v1618 = vrot.slane %v1128, %v1617
      %v1619 = vmul.f32 %v1614, %v1618
      %v1620 = vlaneseq
      %v1621 = vshrl.u32 %v1620, 7
      %v1622 = vsub.s32 2, %v1621
      %v1623 = vrot.slane %v1128, %v1622
      %v1624 = vadd.f32 %v1619, %v1623
      %v1625 = vpack.c.bf16 %v1624, %v1624
      %s1626 = scalar_lea.vmem %s6, 16
      %v1627 = vld [vmem:[%s1626] sm:$0xf]
      %v1628 = vld [vmem:[%s1626 + $0x4] sm:$0xf]
      %v1629 = vld [vmem:[%s1626 + $0x8] sm:$0xf]
      %v1630 = vld [vmem:[%s1626 + $0xc] sm:$0xf]
      %s1631 = scalar_lea.vmem %s7, 1
      %v1632 = vld [vmem:[%s1631] sm:$0x1]
      %v1634 = vlaneseq
      %v1635 = vshrl.u32 %v1634, 7
      %v1636 = vsub.s32 0, %v1635
      %v1637 = vrot.slane %v1632, %v1636
      %v1643 = vunpack.c.l.b16 %v1627
      %v1644 = vunpack.c.l.b16 %v1628
      %v1645 = vunpack.c.l.b16 %v1629
      %v1646 = vunpack.c.l.b16 %v1630
      %v1647 = vpack.c.b16 %v1644, %v1643
      %v1648 = vpack.c.b16 %v1646, %v1645
      %v1652 = vsel %vm425, %v1625, 0
      %1654 = vmatprep.subr.bf16.mxu0 0
      %1655 = vmatpush1.bf16.msra.mxu0 %v1647
      %1656 = vmatprep.subr.bf16.mxu0 0
      %1657 = vmatpush1.bf16.msra.mxu0 %v1648
      %1658 = vmatprep.subr.bf16.mxu0 0
      %1659 = vmatpush1.bf16.msra.mxu0 0
      %1660 = vmatprep.subr.bf16.mxu0 0
      %1661 = vmatpush1.bf16.msra.mxu0 0
      %1662 = vmatprep.subr.bf16.mxu0 0
      %1663 = vmatpush1.bf16.msra.mxu0 0
      %1664 = vmatprep.subr.bf16.mxu0 0
      %1665 = vmatpush1.bf16.msra.mxu0 0
      %1666 = vmatprep.subr.bf16.mxu0 0
      %1667 = vmatpush1.bf16.msra.mxu0 0
      %1668 = vmatprep.subr.bf16.mxu0 0
      %1669 = vmatpush1.bf16.msra.mxu0 0
      %1670 = vmatprep.subr.bf16.mxu0 0
      %1671 = vmatpush1.bf16.msra.mxu0 0
      %1672 = vmatprep.subr.bf16.mxu0 0
      %1673 = vmatpush1.bf16.msra.mxu0 0
      %1674 = vmatprep.subr.bf16.mxu0 0
      %1675 = vmatpush1.bf16.msra.mxu0 0
      %1676 = vmatprep.subr.bf16.mxu0 0
      %1677 = vmatpush1.bf16.msra.mxu0 0
      %1678 = vmatprep.subr.bf16.mxu0 0
      %1679 = vmatpush1.bf16.msra.mxu0 0
      %1680 = vmatprep.subr.bf16.mxu0 0
      %1681 = vmatpush1.bf16.msra.mxu0 0
      %1682 = vmatprep.subr.bf16.mxu0 0
      %1683 = vmatpush1.bf16.msra.mxu0 0
      %1684 = vmatprep.subr.bf16.mxu0 0
      %1685 = vmatpush1.bf16.msra.mxu0 0
      %1686 = vmatprep.mubr.bf16.mxu0 0
      %1687 = vmatmul.mubr.bf16.gmra.mrb[0].mxu0 %v1652
      %v1688 = vpop.f32.mrb[0].mxu0
      %v1689 = vadd.f32 %v1637, %v1688
      %v1690 = vpop.f32.mrb[0].mxu0
      %v1691 = vpop.f32.mrb[0].mxu0
      %v1692 = vpop.f32.mrb[0].mxu0
      %1693 = vdwg.mxu0
      %v1694 = vmul.f32 %v1689, 0.5
      %v1695 = vmul.f32 %v1689, 0.044715
      %v1696 = vmul.f32 %v1695, %v1689
      %v1697 = vmul.f32 %v1696, %v1689
      %v1698 = vadd.f32 %v1689, %v1697
      %v1699 = vmul.f32 %v1698, 0.7978846
      %v1700 = vtanh.pop %v1699
      %v1701 = vadd.f32 %v1700, 1.0
      %v1702 = vmul.f32 %v1694, %v1701
      %v1703 = vpack.c.bf16 %v1702, %v1702
      %s1704 = scalar_lea.vmem %s8, 32
      %v1705 = vld [vmem:[%s1704] sm:$0xf]
      %v1706 = vld [vmem:[%s1704 + $0x4] sm:$0xf]
      %v1707 = vld [vmem:[%s1704 + $0x8] sm:$0xf]
      %v1708 = vld [vmem:[%s1704 + $0xc] sm:$0xf]
      %v1709 = vld [vmem:[%s1704 + $0x10] sm:$0xf]
      %v1710 = vld [vmem:[%s1704 + $0x14] sm:$0xf]
      %v1711 = vld [vmem:[%s1704 + $0x18] sm:$0xf]
      %v1712 = vld [vmem:[%s1704 + $0x1c] sm:$0xf]
      %v1713 = vlaneseq
      %v1714 = vshrl.u32 %v1713, 7
      %v1715 = vsub.s32 3, %v1714
      %v1716 = vrot.slane %v1128, %v1715
      %v1725 = vunpack.c.l.b16 %v1705
      %v1726 = vunpack.c.l.b16 %v1706
      %v1727 = vunpack.c.l.b16 %v1707
      %v1728 = vunpack.c.l.b16 %v1708
      %v1729 = vunpack.c.l.b16 %v1709
      %v1730 = vunpack.c.l.b16 %v1710
      %v1731 = vunpack.c.l.b16 %v1711
      %v1732 = vunpack.c.l.b16 %v1712
      %v1733 = vpack.c.b16 %v1726, %v1725
      %v1734 = vpack.c.b16 %v1728, %v1727
      %v1735 = vpack.c.b16 %v1730, %v1729
      %v1736 = vpack.c.b16 %v1732, %v1731
      %v1742 = vsel %vm1059, %v1703, 0
      %1744 = vmatprep.subr.bf16.mxu0 0
      %1745 = vmatpush1.bf16.msra.mxu0 %v1733
      %1746 = vmatprep.subr.bf16.mxu0 0
      %1747 = vmatpush1.bf16.msra.mxu0 %v1734
      %1748 = vmatprep.subr.bf16.mxu0 0
      %1749 = vmatpush1.bf16.msra.mxu0 %v1735
      %1750 = vmatprep.subr.bf16.mxu0 0
      %1751 = vmatpush1.bf16.msra.mxu0 %v1736
      %1752 = vmatprep.subr.bf16.mxu0 0
      %1753 = vmatpush1.bf16.msra.mxu0 0
      %1754 = vmatprep.subr.bf16.mxu0 0
      %1755 = vmatpush1.bf16.msra.mxu0 0
      %1756 = vmatprep.subr.bf16.mxu0 0
      %1757 = vmatpush1.bf16.msra.mxu0 0
      %1758 = vmatprep.subr.bf16.mxu0 0
      %1759 = vmatpush1.bf16.msra.mxu0 0
      %1760 = vmatprep.subr.bf16.mxu0 0
      %1761 = vmatpush1.bf16.msra.mxu0 0
      %1762 = vmatprep.subr.bf16.mxu0 0
      %1763 = vmatpush1.bf16.msra.mxu0 0
      %1764 = vmatprep.subr.bf16.mxu0 0
      %1765 = vmatpush1.bf16.msra.mxu0 0
      %1766 = vmatprep.subr.bf16.mxu0 0
      %1767 = vmatpush1.bf16.msra.mxu0 0
      %1768 = vmatprep.subr.bf16.mxu0 0
      %1769 = vmatpush1.bf16.msra.mxu0 0
      %1770 = vmatprep.subr.bf16.mxu0 0
      %1771 = vmatpush1.bf16.msra.mxu0 0
      %1772 = vmatprep.subr.bf16.mxu0 0
      %1773 = vmatpush1.bf16.msra.mxu0 0
      %1774 = vmatprep.subr.bf16.mxu0 0
      %1775 = vmatpush1.bf16.msra.mxu0 0
      %1776 = vmatprep.mubr.bf16.mxu0 0
      %1777 = vmatmul.mubr.bf16.gmra.mrb[0].mxu0 %v1742
      %v1778 = vpop.f32.mrb[0].mxu0
      %v1779 = vadd.f32 %v1716, %v1778
      %v1780 = vpop.f32.mrb[0].mxu0
      %v1781 = vpop.f32.mrb[0].mxu0
      %v1782 = vpop.f32.mrb[0].mxu0
      %1783 = vdwg.mxu0
      %v1784 = vadd.f32 %v1624, %v1779
      %v1785 = vsel %vm425, %v1784, 0.0
      %1786 = vadd.xlane.f32.xlu0 %v1785
      %v1787 = vpop.xlane.xlu0 %1786
      %v1788 = vmul.f32 %v1787, %v429
      %v1789 = vsub.f32 %v1784, %v1788
      %v1790 = vmul.f32 %v1789, %v1789
      %v1791 = vsel %vm425, %v1790, 0.0
      %1792 = vadd.xlane.f32.xlu0 %v1791
      %v1793 = vpop.xlane.xlu0 %1792
      %v1794 = vmul.f32 %v1793, %v429
      %v1795 = vadd.f32 %v1794, 1e-12
      %v1796 = vrsqrt.pop %v1795
      %v1797 = vmul.f32 %v1789, %v1796
      %v1798 = vlaneseq
      %v1799 = vshrl.u32 %v1798, 7
      %v1800 = vsub.s32 4, %v1799
      %v1801 = vrot.slane %v1128, %v1800
      %v1802 = vmul.f32 %v1797, %v1801
      %v1803 = vlaneseq
      %v1804 = vshrl.u32 %v1803, 7
      %v1805 = vsub.s32 5, %v1804
      %v1806 = vrot.slane %v1128, %v1805
      %v1807 = vadd.f32 %v1802, %v1806
      %v1808 = vpack.c.bf16 %v1807, %v1807
      %v1809 = vld [vmem:[%s10] sm:$0xf]
      %v1810 = vld [vmem:[%s10 + $0x4] sm:$0xf]
      %v1811 = vld [vmem:[%s10 + $0x8] sm:$0xf]
      %v1812 = vld [vmem:[%s10 + $0xc] sm:$0xf]
      %v1817 = vunpack.c.l.b16 %v1809
      %v1818 = vunpack.c.l.b16 %v1810
      %v1819 = vunpack.c.l.b16 %v1811
      %v1820 = vunpack.c.l.b16 %v1812
      %v1821 = vpack.c.b16 %v1818, %v1817
      %v1822 = vpack.c.b16 %v1820, %v1819
      %v1826 = vrot.slane %v423, 2
      %v1829 = vsel %vm425, %v1808, 0
      %1831 = vmatprep.subr.bf16.mxu0 0
      %1832 = vmatpush1.bf16.msra.mxu0 %v1821
      %1833 = vmatprep.subr.bf16.mxu0 0
      %1834 = vmatpush1.bf16.msra.mxu0 %v1822
      %1835 = vmatprep.subr.bf16.mxu0 0
      %1836 = vmatpush1.bf16.msra.mxu0 0
      %1837 = vmatprep.subr.bf16.mxu0 0
      %1838 = vmatpush1.bf16.msra.mxu0 0
      %1839 = vmatprep.subr.bf16.mxu0 0
      %1840 = vmatpush1.bf16.msra.mxu0 0
      %1841 = vmatprep.subr.bf16.mxu0 0
      %1842 = vmatpush1.bf16.msra.mxu0 0
      %1843 = vmatprep.subr.bf16.mxu0 0
      %1844 = vmatpush1.bf16.msra.mxu0 0
      %1845 = vmatprep.subr.bf16.mxu0 0
      %1846 = vmatpush1.bf16.msra.mxu0 0
      %1847 = vmatprep.subr.bf16.mxu0 0
      %1848 = vmatpush1.bf16.msra.mxu0 0
      %1849 = vmatprep.subr.bf16.mxu0 0
      %1850 = vmatpush1.bf16.msra.mxu0 0
      %1851 = vmatprep.subr.bf16.mxu0 0
      %1852 = vmatpush1.bf16.msra.mxu0 0
      %1853 = vmatprep.subr.bf16.mxu0 0
      %1854 = vmatpush1.bf16.msra.mxu0 0
      %1855 = vmatprep.subr.bf16.mxu0 0
      %1856 = vmatpush1.bf16.msra.mxu0 0
      %1857 = vmatprep.subr.bf16.mxu0 0
      %1858 = vmatpush1.bf16.msra.mxu0 0
      %1859 = vmatprep.subr.bf16.mxu0 0
      %1860 = vmatpush1.bf16.msra.mxu0 0
      %1861 = vmatprep.subr.bf16.mxu0 0
      %1862 = vmatpush1.bf16.msra.mxu0 0
      %1863 = vmatprep.mubr.bf16.mxu0 0
      %1864 = vmatmul.mubr.bf16.gmra.mrb[0].mxu0 %v1829
      %v1865 = vpop.f32.mrb[0].mxu0
      %v1866 = vadd.f32 %v1826, %v1865
      %v1867 = vpop.f32.mrb[0].mxu0
      %v1868 = vpop.f32.mrb[0].mxu0
      %v1869 = vpop.f32.mrb[0].mxu0
      %1870 = vdwg.mxu0
      %v1871 = vtanh.pop %v1866
      %v1872 = vpack.c.bf16 %v1871, %v1871
      %v1873 = vld [vmem:[%s11] sm:$0xf]
      %v1874 = vld [vmem:[%s11 + $0x4] sm:$0xf]
      %v1875 = vld [vmem:[%s11 + $0x8] sm:$0xf]
      %v1876 = vld [vmem:[%s11 + $0xc] sm:$0xf]
      %v1877 = vld [vmem:[%s12] sm:$0x1]
      %v1882 = vunpack.c.l.b16 %v1873
      %v1883 = vunpack.c.l.b16 %v1874
      %v1884 = vunpack.c.l.b16 %v1875
      %v1885 = vunpack.c.l.b16 %v1876
      %v1886 = vpack.c.b16 %v1883, %v1882
      %v1887 = vpack.c.b16 %v1885, %v1884
      %v1891 = vsel %vm425, %v1872, 0
      %1893 = vmatprep.subr.bf16.mxu0 0
      %1894 = vmatpush1.bf16.msra.mxu0 %v1886
      %1895 = vmatprep.subr.bf16.mxu0 0
      %1896 = vmatpush1.bf16.msra.mxu0 %v1887
      %1897 = vmatprep.subr.bf16.mxu0 0
      %1898 = vmatpush1.bf16.msra.mxu0 0
      %1899 = vmatprep.subr.bf16.mxu0 0
      %1900 = vmatpush1.bf16.msra.mxu0 0
      %1901 = vmatprep.subr.bf16.mxu0 0
      %1902 = vmatpush1.bf16.msra.mxu0 0
      %1903 = vmatprep.subr.bf16.mxu0 0
      %1904 = vmatpush1.bf16.msra.mxu0 0
      %1905 = vmatprep.subr.bf16.mxu0 0
      %1906 = vmatpush1.bf16.msra.mxu0 0
      %1907 = vmatprep.subr.bf16.mxu0 0
      %1908 = vmatpush1.bf16.msra.mxu0 0
      %1909 = vmatprep.subr.bf16.mxu0 0
      %1910 = vmatpush1.bf16.msra.mxu0 0
      %1911 = vmatprep.subr.bf16.mxu0 0
      %1912 = vmatpush1.bf16.msra.mxu0 0
      %1913 = vmatprep.subr.bf16.mxu0 0
      %1914 = vmatpush1.bf16.msra.mxu0 0
      %1915 = vmatprep.subr.bf16.mxu0 0
      %1916 = vmatpush1.bf16.msra.mxu0 0
      %1917 = vmatprep.subr.bf16.mxu0 0
      %1918 = vmatpush1.bf16.msra.mxu0 0
      %1919 = vmatprep.subr.bf16.mxu0 0
      %1920 = vmatpush1.bf16.msra.mxu0 0
      %1921 = vmatprep.subr.bf16.mxu0 0
      %1922 = vmatpush1.bf16.msra.mxu0 0
      %1923 = vmatprep.subr.bf16.mxu0 0
      %1924 = vmatpush1.bf16.msra.mxu0 0
      %1925 = vmatprep.mubr.bf16.mxu0 0
      %1926 = vmatmul.mubr.bf16.gmra.mrb[0].mxu0 %v1891
      %v1927 = vpop.f32.mrb[0].mxu0
      %v1928 = vadd.f32 %v1877, %v1927
      %v1929 = vpop.f32.mrb[0].mxu0
      %v1930 = vpop.f32.mrb[0].mxu0
      %v1931 = vpop.f32.mrb[0].mxu0
      %1932 = vdwg.mxu0
      %v1933 = vlaneseq
      %v1934 = vshrl.u32 %v1933, 7
      %v1935 = vsub.s32 0, %v1934
      %v1936 = vrot.slane %v1928, %v1935
      %1937 = vst [vmem:[%s415] sm:$0xff] %v1936
      %p1938 = scmp.lt.s32.totalorder %s30, 1
      %s1939 = scalar_select %p1938, %s30, 1
      %s1940 = smul.addr %s1939, 8
      %s1941 = scalar_lea.vmem %s13, %s1940
      // Predicated region
      $region69: #{kobert_classifier_forward.1} parent=67 // pred_check
        %p1942 = pneg %p305
      $region70: #{kobert_classifier_forward.1} parent=67 // pred_check_branch
        %1944 = sbr.rel (%p1942) target = $region72
      $region71: #{kobert_classifier_forward.1} parent=67 // pred_region
        _
      $region72: #{kobert_classifier_forward.1} parent=67 // pred_fallthru
        _
    $region68: #{kobert_classifier_forward.1} parent=5 // pred_fallthru
      _
    %p1945 = scmp.le.s32.totalorder 2, %s25
    // Predicated region
    $region73: #{kobert_classifier_forward.1} parent=5 // pred_check
      %p1946 = pneg %p1945
    $region74: #{kobert_classifier_forward.1} parent=5 // pred_check_branch
      %1948 = sbr.rel (%p1946) target = $region76
    $region75: #{kobert_classifier_forward.1} parent=5 // pred_region
      %s1949 = ssub.s32 %s25, 2
      // Predicated region
      $region77: #{kobert_classifier_forward.1} parent=75 // pred_check
        %p1950 = pneg %p311
      $region78: #{kobert_classifier_forward.1} parent=75 // pred_check_branch
        %1952 = sbr.rel (%p1950) target = $region80
      $region79: #{kobert_classifier_forward.1} parent=75 // pred_region
        %p1953 = scmp.lt.s32.totalorder %s31, 1
        %s1954 = scalar_select %p1953, %s31, 1
        %s1955 = smul.addr %s1954, 8
        %s1956 = scalar_lea.vmem %s13, %s1955
      $region80: #{kobert_classifier_forward.1} parent=75 // pred_fallthru
        _
    $region76: #{kobert_classifier_forward.1} parent=5 // pred_fallthru
      _
  $region6: #{kobert_classifier_forward.1} parent=0 // loop_footer
    %s29 = sadd.s32 1, %s25
  $region7: #{kobert_classifier_forward.1} parent=0 // loop_footer_branch
    %24 = sbr.rel target = $region3
  $region8: #{kobert_classifier_forward.1} parent=0 // loop_exit
    _

</llo_original>
